<compile_context>
chip_gen: v7x
topology: tpu7x:2x2x1
jax: 0.10.0
libtpu: 0.0.40
codegen_flags: <defaults>
</compile_context>

<pallas_src>
import jax
import jax.numpy as jnp
from jax import lax
from jax.experimental import pallas as pl
from jax.experimental.pallas import tpu as pltpu


def lstm_forecaster_kernel(x_ref,      # (T*B, F)  time-major flattened input (f32)
                           wih0_ref,   # (F, 4H)   layer0 input weights  (bf16, pre-T, gate-scaled)
                           whh0_ref,   # (H, 4H)   layer0 recurrent wts  (bf16, pre-T, gate-scaled)
                           b0_ref,     # (1, 4H)   layer0 combined bias  (f32, gate-scaled)
                           wih1_ref,   # (H, 4H)   layer1 input weights  (bf16, pre-T, gate-scaled)
                           whh1_ref,   # (H, 4H)   layer1 recurrent wts  (bf16, pre-T, gate-scaled)
                           b1_ref,     # (1, 4H)   layer1 combined bias  (f32, gate-scaled)
                           wh_ref,     # (H, O)    head weight (bf16, pre-T)
                           bh_ref,     # (1, O)    head bias (f32)
                           out_ref,    # (B, O)    output (f32)
                           xp0_ref):   # (T*B, 4H) scratch: layer0 input projection (f32)
    f32, bf16 = jnp.float32, jnp.bfloat16
    B = out_ref.shape[0]
    T = x_ref.shape[0] // B
    H = whh0_ref.shape[0]
    G = 4 * H

    # Hoist weight loads (kept bf16 -- native MXU operand dtype) and bias
    # broadcasts out of the loops (JAX does not CSE broadcast_in_dim).
    wih1 = wih1_ref[...]                                           # (H, G)  bf16
    whh01 = jnp.concatenate([whh0_ref[...], whh1_ref[...]], 1)     # (H, 2G) bf16
    b1b = jnp.broadcast_to(b1_ref[...], (B, G))                    # (B, G)  f32

    def activations(gates, c):
        # The 0.5 pre-scale for i/f/o lanes is folded into the weights/biases,
        # so a single full-width tanh implements sigmoid(z)=0.5*tanh(z/2)+0.5.
        tg = jnp.tanh(gates)
        i = 0.5 * tg[:, 0 * H:1 * H] + 0.5
        f = 0.5 * tg[:, 1 * H:2 * H] + 0.5
        g = tg[:, 2 * H:3 * H]
        o = 0.5 * tg[:, 3 * H:4 * H] + 0.5
        c_new = f * c + i * g
        h_new = o * jnp.tanh(c_new)
        return h_new, c_new

    # ---- Layer-0 input projection: one dense matmul, off the recurrent chain ----
    xp0_ref[...] = (jnp.dot(x_ref[...].astype(bf16), wih0_ref[...],
                            preferred_element_type=f32) + b0_ref[...])

    zeros = jnp.zeros((B, H), f32)

    # ---- Prologue: layer-0 step 0 (h0_prev == 0, recurrent term is zero) --------
    h0, c0 = activations(xp0_ref[0:B, :], zeros)
    g1 = jnp.dot(h0.astype(bf16), wih1, preferred_element_type=f32) + b1b
    h1, c1 = zeros, zeros

    # ---- Skewed fused recurrence: step s = layer-0 step s + layer-1 step s-1 ----
    def fused_step(s, carry):
        h0, c0, h1, c1, g1 = carry
        # One 256-wide recurrent dot: LHS=[h0;h1], RHS=[Whh0|Whh1]; only the
        # diagonal (B, G) blocks of the (2B, 2G) result are consumed.
        lhs = jnp.concatenate([h0, h1], axis=0).astype(bf16)        # (2B, H)
        rec = jnp.dot(lhs, whh01, preferred_element_type=f32)       # (2B, 2G)
        row = pl.multiple_of(s * B, B)
        gates0 = xp0_ref[pl.ds(row, B), :] + rec[0:B, 0:G]
        h0n, c0n = activations(gates0, c0)                          # layer 0, step s
        gates1 = g1 + rec[B:2 * B, G:2 * G]
        h1n, c1n = activations(gates1, c1)                          # layer 1, step s-1
        # Layer-1 input projection for step s (off both layers' serial work).
        g1n = jnp.dot(h0n.astype(bf16), wih1, preferred_element_type=f32) + b1b
        return (h0n, c0n, h1n, c1n, g1n)

    h0, c0, h1, c1, g1 = lax.fori_loop(1, T, fused_step,
                                       (h0, c0, h1, c1, g1), unroll=True)

    # ---- Epilogue: layer-1 step T-1 ----------------------------------------------
    gates1 = g1 + jnp.dot(h1.astype(bf16), whh1_ref[...], preferred_element_type=f32)
    h1, _ = activations(gates1, c1)

    # ---- Head: out = h1[T-1] @ W_head^T + b_head ----------------------------------
    out_ref[...] = (jnp.dot(h1.astype(bf16), wh_ref[...],
                            preferred_element_type=f32)
                    + bh_ref[...]).astype(out_ref.dtype)


def lstm_forecaster(x, kp):
    """x: (B, T, F) float32 (batch_first, like the PyTorch module). Returns (B, O) f32."""
    B, T, F = x.shape
    H = kp["whh0"].shape[0]
    G = 4 * H
    O = kp["wh"].shape[1]
    # time-major + flattened: row t*B + b holds x[b, t, :]
    x_tm = jnp.transpose(x, (1, 0, 2)).reshape(T * B, F)

    # Advisory cost estimate for XLA scheduling around this tiny custom call.
    flops = 2 * T * B * G * (F + 3 * H) + 2 * B * H * O
    transcendentals = 2 * T * B * (G + H)
    bytes_accessed = int(x.size * 4 + B * O * 4 +
                         sum(int(v.size) * v.dtype.itemsize for v in kp.values()))

    vmem = pl.BlockSpec(memory_space=pltpu.MemorySpace.VMEM)
    return pl.pallas_call(
        lstm_forecaster_kernel,
        out_shape=jax.ShapeDtypeStruct((B, O), jnp.float32),
        in_specs=[vmem] * 9,
        out_specs=vmem,
        scratch_shapes=[pltpu.VMEM((T * B, G), jnp.float32)],
        cost_estimate=pl.CostEstimate(flops=flops,
                                      transcendentals=transcendentals,
                                      bytes_accessed=bytes_accessed),
    )(x_tm,
      kp["wih0"], kp["whh0"], kp["b0"],
      kp["wih1"], kp["whh1"], kp["b1"],
      kp["wh"], kp["bh"])


def init_params(key, input_features, hidden_size, output_timestamps):
    """Raw PyTorch-layout params, U(-1/sqrt(H), 1/sqrt(H)), f32."""
    H, F, O = hidden_size, input_features, output_timestamps
    k = 1.0 / jnp.sqrt(jnp.float32(H))
    keys = jax.random.split(key, 10)

    def u(k_, shape):
        return jax.random.uniform(k_, shape, jnp.float32, -k, k)

    return {
        "w_ih0": u(keys[0], (4 * H, F)),  "w_hh0": u(keys[1], (4 * H, H)),
        "b_ih0": u(keys[2], (4 * H,)),    "b_hh0": u(keys[3], (4 * H,)),
        "w_ih1": u(keys[4], (4 * H, H)),  "w_hh1": u(keys[5], (4 * H, H)),
        "b_ih1": u(keys[6], (4 * H,)),    "b_hh1": u(keys[7], (4 * H,)),
        "w_head": u(keys[8], (O, H)),     "b_head": u(keys[9], (O,)),
    }


def prep_kernel_params(raw, hidden_size):
    """Kernel-layout params: pre-transposed (row-vector @ W), bf16 weights,
    combined b_ih+b_hh biases, and the 0.5 sigmoid-via-tanh pre-scale folded
    into the i/f/o gate columns of both weights and biases (g gate unscaled).
    0.5 scaling is exact in binary, so bf16 rounding matches the reference's
    bf16-rounded unscaled weights."""
    H = hidden_size
    bf16 = jnp.bfloat16
    gate_scale = jnp.concatenate([jnp.full((2 * H,), 0.5, jnp.float32),
                                  jnp.ones((H,), jnp.float32),
                                  jnp.full((H,), 0.5, jnp.float32)])

    def wt(w):    # (4H, in) -> (in, 4H), gate-scaled, bf16
        return (w.T * gate_scale[None, :]).astype(bf16)

    def bias(b_ih, b_hh):
        return ((b_ih + b_hh) * gate_scale).reshape(1, 4 * H).astype(jnp.float32)

    return {
        "wih0": wt(raw["w_ih0"]), "whh0": wt(raw["w_hh0"]),
        "b0": bias(raw["b_ih0"], raw["b_hh0"]),
        "wih1": wt(raw["w_ih1"]), "whh1": wt(raw["w_hh1"]),
        "b1": bias(raw["b_ih1"], raw["b_hh1"]),
        "wh": raw["w_head"].T.astype(bf16),
        "bh": raw["b_head"].reshape(1, -1).astype(jnp.float32),
    }


def reference_forward(x, raw):
    """Pure-JAX reference of the PyTorch eval-mode forward (f32 math; weights
    rounded to bf16 to match the kernel's stored precision)."""
    B, T, F = x.shape
    H = raw["w_hh0"].shape[1]

    def q(w):
        return w.astype(jnp.bfloat16).astype(jnp.float32)

    wih0, whh0 = q(raw["w_ih0"]).T, q(raw["w_hh0"]).T
    wih1, whh1 = q(raw["w_ih1"]).T, q(raw["w_hh1"]).T
    wh = q(raw["w_head"]).T
    b0 = raw["b_ih0"] + raw["b_hh0"]
    b1 = raw["b_ih1"] + raw["b_hh1"]
    bh = raw["b_head"]

    def cell(x_t, h, c, wih, whh, b):
        g = x_t @ wih + h @ whh + b
        i = jax.nn.sigmoid(g[:, :H])
        f = jax.nn.sigmoid(g[:, H:2 * H])
        gg = jnp.tanh(g[:, 2 * H:3 * H])
        o = jax.nn.sigmoid(g[:, 3 * H:])
        c = f * c + i * gg
        return o * jnp.tanh(c), c

    h0 = c0 = h1 = c1 = jnp.zeros((B, H), jnp.float32)
    for t in range(T):
        h0, c0 = cell(x[:, t, :], h0, c0, wih0, whh0, b0)
        h1, c1 = cell(h0, h1, c1, wih1, whh1, b1)   # eval: no inter-layer dropout
    return h1 @ wh + bh


if __name__ == "__main__":
    B, T, F = 2, 8, 6          # batch, seq, input_features (module default F=6)
    H, O = 32, 36              # small hidden (4H=128 = one lane tile); output_timestamps=36

    key = jax.random.PRNGKey(0)
    kx, kp_key = jax.random.split(key)
    x = jax.random.normal(kx, (B, T, F), jnp.float32)
    raw = init_params(kp_key, F, H, O)
    kparams = prep_kernel_params(raw, H)

    out = jax.block_until_ready(lstm_forecaster(x, kparams))
    ref = reference_forward(x, raw)

    assert out.shape == (B, O)
    # bf16 LHS casts in the kernel introduce sub-percent drift vs the f32 reference.
    assert jnp.allclose(out, ref, atol=1e-2, rtol=1e-2), float(jnp.max(jnp.abs(out - ref)))

    print("KERNEL_OK")
</pallas_src>

<mosaic_0001>
module attributes {stable_mosaic.version = 11 : i64} {
  func.func @lstm_forecaster_kernel(%arg0: memref<16x6xf32, #tpu.memory_space<vmem>>, %arg1: memref<6x128xbf16, #tpu.memory_space<vmem>>, %arg2: memref<32x128xbf16, #tpu.memory_space<vmem>>, %arg3: memref<1x128xf32, #tpu.memory_space<vmem>>, %arg4: memref<32x128xbf16, #tpu.memory_space<vmem>>, %arg5: memref<32x128xbf16, #tpu.memory_space<vmem>>, %arg6: memref<1x128xf32, #tpu.memory_space<vmem>>, %arg7: memref<32x36xbf16, #tpu.memory_space<vmem>>, %arg8: memref<1x36xf32, #tpu.memory_space<vmem>>, %arg9: memref<2x36xf32, #tpu.memory_space<vmem>>, %arg10: memref<16x128xf32, #tpu.memory_space<vmem>>) attributes {dimension_semantics = [], scalar_prefetch = 0 : i64, scratch_operands = 1 : i64, tpu.core_type = #tpu.core_type<tc>} {
    %c0 = arith.constant 0 : index
    %c0_0 = arith.constant 0 : index
    %0 = vector.load %arg4[%c0, %c0_0] : memref<32x128xbf16, #tpu.memory_space<vmem>>, vector<32x128xbf16>
    %c0_1 = arith.constant 0 : index
    %c0_2 = arith.constant 0 : index
    %1 = vector.load %arg2[%c0_1, %c0_2] : memref<32x128xbf16, #tpu.memory_space<vmem>>, vector<32x128xbf16>
    %c0_3 = arith.constant 0 : index
    %c0_4 = arith.constant 0 : index
    %2 = vector.load %arg5[%c0_3, %c0_4] : memref<32x128xbf16, #tpu.memory_space<vmem>>, vector<32x128xbf16>
    %3 = tpu.concatenate %1, %2 in 1 : vector<32x128xbf16>, vector<32x128xbf16> -> vector<32x256xbf16>
    %c0_5 = arith.constant 0 : index
    %c0_6 = arith.constant 0 : index
    %4 = vector.load %arg6[%c0_5, %c0_6] : memref<1x128xf32, #tpu.memory_space<vmem>>, vector<1x128xf32>
    %5 = vector.shape_cast %4 : vector<1x128xf32> to vector<1x128xf32>
    %6 = vector.broadcast %5 : vector<1x128xf32> to vector<2x128xf32>
    %c0_7 = arith.constant 0 : index
    %c0_8 = arith.constant 0 : index
    %7 = vector.load %arg0[%c0_7, %c0_8] : memref<16x6xf32, #tpu.memory_space<vmem>>, vector<16x6xf32>
    %8 = arith.truncf %7 : vector<16x6xf32> to vector<16x6xbf16>
    %c0_9 = arith.constant 0 : index
    %c0_10 = arith.constant 0 : index
    %9 = vector.load %arg1[%c0_9, %c0_10] : memref<6x128xbf16, #tpu.memory_space<vmem>>, vector<6x128xbf16>
    %cst = arith.constant dense<0.000000e+00> : vector<16x128xf32>
    %10 = tpu.matmul %8, %9, %cst {dimension_numbers = #tpu.dot_dimension_numbers<[1], [0], [0], [1], [0, 0, 1, 1], [], []>} : vector<16x6xbf16>, vector<6x128xbf16>, vector<16x128xf32> -> vector<16x128xf32>
    %c0_11 = arith.constant 0 : index
    %c0_12 = arith.constant 0 : index
    %11 = vector.load %arg3[%c0_11, %c0_12] : memref<1x128xf32, #tpu.memory_space<vmem>>, vector<1x128xf32>
    %12 = vector.broadcast %11 : vector<1x128xf32> to vector<16x128xf32>
    %13 = arith.addf %10, %12 : vector<16x128xf32>
    %c0_13 = arith.constant 0 : index
    %c0_14 = arith.constant 0 : index
    %14 = vector.load %arg10[%c0_13, %c0_14] : memref<16x128xf32, #tpu.memory_space<vmem>>, vector<16x128xf32>
    tpu.vector_store %arg10[%c0_13, %c0_14], %13 {strides = array<i32>} : memref<16x128xf32, #tpu.memory_space<vmem>>, vector<16x128xf32>,
    %cst_15 = arith.constant 0.000000e+00 : f32
    %15 = vector.broadcast %cst_15 : f32 to vector<2x32xf32>
    %c0_16 = arith.constant 0 : index
    %c0_17 = arith.constant 0 : index
    %16 = vector.load %arg10[%c0_16, %c0_17] : memref<16x128xf32, #tpu.memory_space<vmem>>, vector<2x128xf32>
    %17 = math.tanh %16 : vector<2x128xf32>
    %18 = vector.extract_strided_slice %17 {offsets = [0, 0], sizes = [2, 32], strides = [1, 1]} : vector<2x128xf32> to vector<2x32xf32>
    %cst_18 = arith.constant 5.000000e-01 : f32
    %19 = vector.broadcast %cst_18 : f32 to vector<2x32xf32>
    %20 = arith.mulf %19, %18 : vector<2x32xf32>
    %cst_19 = arith.constant 5.000000e-01 : f32
    %21 = vector.broadcast %cst_19 : f32 to vector<2x32xf32>
    %22 = arith.addf %20, %21 : vector<2x32xf32>
    %23 = vector.extract_strided_slice %17 {offsets = [0, 32], sizes = [2, 32], strides = [1, 1]} : vector<2x128xf32> to vector<2x32xf32>
    %cst_20 = arith.constant 5.000000e-01 : f32
    %24 = vector.broadcast %cst_20 : f32 to vector<2x32xf32>
    %25 = arith.mulf %24, %23 : vector<2x32xf32>
    %cst_21 = arith.constant 5.000000e-01 : f32
    %26 = vector.broadcast %cst_21 : f32 to vector<2x32xf32>
    %27 = arith.addf %25, %26 : vector<2x32xf32>
    %28 = vector.extract_strided_slice %17 {offsets = [0, 64], sizes = [2, 32], strides = [1, 1]} : vector<2x128xf32> to vector<2x32xf32>
    %29 = vector.extract_strided_slice %17 {offsets = [0, 96], sizes = [2, 32], strides = [1, 1]} : vector<2x128xf32> to vector<2x32xf32>
    %cst_22 = arith.constant 5.000000e-01 : f32
    %30 = vector.broadcast %cst_22 : f32 to vector<2x32xf32>
    %31 = arith.mulf %30, %29 : vector<2x32xf32>
    %cst_23 = arith.constant 5.000000e-01 : f32
    %32 = vector.broadcast %cst_23 : f32 to vector<2x32xf32>
    %33 = arith.addf %31, %32 : vector<2x32xf32>
    %34 = arith.mulf %27, %15 : vector<2x32xf32>
    %35 = arith.mulf %22, %28 : vector<2x32xf32>
    %36 = arith.addf %34, %35 : vector<2x32xf32>
    %37 = math.tanh %36 : vector<2x32xf32>
    %38 = arith.mulf %33, %37 : vector<2x32xf32>
    %39 = arith.truncf %38 : vector<2x32xf32> to vector<2x32xbf16>
    %cst_24 = arith.constant dense<0.000000e+00> : vector<2x128xf32>
    %40 = tpu.matmul %39, %0, %cst_24 {dimension_numbers = #tpu.dot_dimension_numbers<[1], [0], [0], [1], [0, 0, 1, 1], [], []>} : vector<2x32xbf16>, vector<32x128xbf16>, vector<2x128xf32> -> vector<2x128xf32>
    %41 = arith.addf %40, %6 : vector<2x128xf32>
    %c1_i32 = arith.constant 1 : i32
    %42 = tpu.concatenate %38, %15 in 0 : vector<2x32xf32>, vector<2x32xf32> -> vector<4x32xf32>
    %43 = arith.truncf %42 : vector<4x32xf32> to vector<4x32xbf16>
    %cst_25 = arith.constant dense<0.000000e+00> : vector<4x256xf32>
    %44 = tpu.matmul %43, %3, %cst_25 {dimension_numbers = #tpu.dot_dimension_numbers<[1], [0], [0], [1], [0, 0, 1, 1], [], []>} : vector<4x32xbf16>, vector<32x256xbf16>, vector<4x256xf32> -> vector<4x256xf32>
    %c2_i32 = arith.constant 2 : i32
    %45 = arith.muli %c1_i32, %c2_i32 : i32
    %46 = tpu.assume_multiple %45, 2 : i32
    %47 = arith.index_cast %46 : i32 to index
    %c0_26 = arith.constant 0 : index
    %48 = vector.load %arg10[%47, %c0_26] : memref<16x128xf32, #tpu.memory_space<vmem>>, vector<2x128xf32>
    %49 = vector.extract_strided_slice %44 {offsets = [0, 0], sizes = [2, 128], strides = [1, 1]} : vector<4x256xf32> to vector<2x128xf32>
    %50 = arith.addf %48, %49 : vector<2x128xf32>
    %51 = math.tanh %50 : vector<2x128xf32>
    %52 = vector.extract_strided_slice %51 {offsets = [0, 0], sizes = [2, 32], strides = [1, 1]} : vector<2x128xf32> to vector<2x32xf32>
    %cst_27 = arith.constant 5.000000e-01 : f32
    %53 = vector.broadcast %cst_27 : f32 to vector<2x32xf32>
    %54 = arith.mulf %53, %52 : vector<2x32xf32>
    %cst_28 = arith.constant 5.000000e-01 : f32
    %55 = vector.broadcast %cst_28 : f32 to vector<2x32xf32>
    %56 = arith.addf %54, %55 : vector<2x32xf32>
    %57 = vector.extract_strided_slice %51 {offsets = [0, 32], sizes = [2, 32], strides = [1, 1]} : vector<2x128xf32> to vector<2x32xf32>
    %cst_29 = arith.constant 5.000000e-01 : f32
    %58 = vector.broadcast %cst_29 : f32 to vector<2x32xf32>
    %59 = arith.mulf %58, %57 : vector<2x32xf32>
    %cst_30 = arith.constant 5.000000e-01 : f32
    %60 = vector.broadcast %cst_30 : f32 to vector<2x32xf32>
    %61 = arith.addf %59, %60 : vector<2x32xf32>
    %62 = vector.extract_strided_slice %51 {offsets = [0, 64], sizes = [2, 32], strides = [1, 1]} : vector<2x128xf32> to vector<2x32xf32>
    %63 = vector.extract_strided_slice %51 {offsets = [0, 96], sizes = [2, 32], strides = [1, 1]} : vector<2x128xf32> to vector<2x32xf32>
    %cst_31 = arith.constant 5.000000e-01 : f32
    %64 = vector.broadcast %cst_31 : f32 to vector<2x32xf32>
    %65 = arith.mulf %64, %63 : vector<2x32xf32>
    %cst_32 = arith.constant 5.000000e-01 : f32
    %66 = vector.broadcast %cst_32 : f32 to vector<2x32xf32>
    %67 = arith.addf %65, %66 : vector<2x32xf32>
    %68 = arith.mulf %61, %36 : vector<2x32xf32>
    %69 = arith.mulf %56, %62 : vector<2x32xf32>
    %70 = arith.addf %68, %69 : vector<2x32xf32>
    %71 = math.tanh %70 : vector<2x32xf32>
    %72 = arith.mulf %67, %71 : vector<2x32xf32>
    %73 = vector.extract_strided_slice %44 {offsets = [2, 128], sizes = [2, 128], strides = [1, 1]} : vector<4x256xf32> to vector<2x128xf32>
    %74 = arith.addf %41, %73 : vector<2x128xf32>
    %75 = math.tanh %74 : vector<2x128xf32>
    %76 = vector.extract_strided_slice %75 {offsets = [0, 0], sizes = [2, 32], strides = [1, 1]} : vector<2x128xf32> to vector<2x32xf32>
    %cst_33 = arith.constant 5.000000e-01 : f32
    %77 = vector.broadcast %cst_33 : f32 to vector<2x32xf32>
    %78 = arith.mulf %77, %76 : vector<2x32xf32>
    %cst_34 = arith.constant 5.000000e-01 : f32
    %79 = vector.broadcast %cst_34 : f32 to vector<2x32xf32>
    %80 = arith.addf %78, %79 : vector<2x32xf32>
    %81 = vector.extract_strided_slice %75 {offsets = [0, 32], sizes = [2, 32], strides = [1, 1]} : vector<2x128xf32> to vector<2x32xf32>
    %cst_35 = arith.constant 5.000000e-01 : f32
    %82 = vector.broadcast %cst_35 : f32 to vector<2x32xf32>
    %83 = arith.mulf %82, %81 : vector<2x32xf32>
    %cst_36 = arith.constant 5.000000e-01 : f32
    %84 = vector.broadcast %cst_36 : f32 to vector<2x32xf32>
    %85 = arith.addf %83, %84 : vector<2x32xf32>
    %86 = vector.extract_strided_slice %75 {offsets = [0, 64], sizes = [2, 32], strides = [1, 1]} : vector<2x128xf32> to vector<2x32xf32>
    %87 = vector.extract_strided_slice %75 {offsets = [0, 96], sizes = [2, 32], strides = [1, 1]} : vector<2x128xf32> to vector<2x32xf32>
    %cst_37 = arith.constant 5.000000e-01 : f32
    %88 = vector.broadcast %cst_37 : f32 to vector<2x32xf32>
    %89 = arith.mulf %88, %87 : vector<2x32xf32>
    %cst_38 = arith.constant 5.000000e-01 : f32
    %90 = vector.broadcast %cst_38 : f32 to vector<2x32xf32>
    %91 = arith.addf %89, %90 : vector<2x32xf32>
    %92 = arith.mulf %85, %15 : vector<2x32xf32>
    %93 = arith.mulf %80, %86 : vector<2x32xf32>
    %94 = arith.addf %92, %93 : vector<2x32xf32>
    %95 = math.tanh %94 : vector<2x32xf32>
    %96 = arith.mulf %91, %95 : vector<2x32xf32>
    %97 = arith.truncf %72 : vector<2x32xf32> to vector<2x32xbf16>
    %cst_39 = arith.constant dense<0.000000e+00> : vector<2x128xf32>
    %98 = tpu.matmul %97, %0, %cst_39 {dimension_numbers = #tpu.dot_dimension_numbers<[1], [0], [0], [1], [0, 0, 1, 1], [], []>} : vector<2x32xbf16>, vector<32x128xbf16>, vector<2x128xf32> -> vector<2x128xf32>
    %99 = arith.addf %98, %6 : vector<2x128xf32>
    %c2_i32_40 = arith.constant 2 : i32
    %100 = tpu.concatenate %72, %96 in 0 : vector<2x32xf32>, vector<2x32xf32> -> vector<4x32xf32>
    %101 = arith.truncf %100 : vector<4x32xf32> to vector<4x32xbf16>
    %cst_41 = arith.constant dense<0.000000e+00> : vector<4x256xf32>
    %102 = tpu.matmul %101, %3, %cst_41 {dimension_numbers = #tpu.dot_dimension_numbers<[1], [0], [0], [1], [0, 0, 1, 1], [], []>} : vector<4x32xbf16>, vector<32x256xbf16>, vector<4x256xf32> -> vector<4x256xf32>
    %c2_i32_42 = arith.constant 2 : i32
    %103 = arith.muli %c2_i32_40, %c2_i32_42 : i32
    %104 = tpu.assume_multiple %103, 2 : i32
    %105 = arith.index_cast %104 : i32 to index
    %c0_43 = arith.constant 0 : index
    %106 = vector.load %arg10[%105, %c0_43] : memref<16x128xf32, #tpu.memory_space<vmem>>, vector<2x128xf32>
    %107 = vector.extract_strided_slice %102 {offsets = [0, 0], sizes = [2, 128], strides = [1, 1]} : vector<4x256xf32> to vector<2x128xf32>
    %108 = arith.addf %106, %107 : vector<2x128xf32>
    %109 = math.tanh %108 : vector<2x128xf32>
    %110 = vector.extract_strided_slice %109 {offsets = [0, 0], sizes = [2, 32], strides = [1, 1]} : vector<2x128xf32> to vector<2x32xf32>
    %cst_44 = arith.constant 5.000000e-01 : f32
    %111 = vector.broadcast %cst_44 : f32 to vector<2x32xf32>
    %112 = arith.mulf %111, %110 : vector<2x32xf32>
    %cst_45 = arith.constant 5.000000e-01 : f32
    %113 = vector.broadcast %cst_45 : f32 to vector<2x32xf32>
    %114 = arith.addf %112, %113 : vector<2x32xf32>
    %115 = vector.extract_strided_slice %109 {offsets = [0, 32], sizes = [2, 32], strides = [1, 1]} : vector<2x128xf32> to vector<2x32xf32>
    %cst_46 = arith.constant 5.000000e-01 : f32
    %116 = vector.broadcast %cst_46 : f32 to vector<2x32xf32>
    %117 = arith.mulf %116, %115 : vector<2x32xf32>
    %cst_47 = arith.constant 5.000000e-01 : f32
    %118 = vector.broadcast %cst_47 : f32 to vector<2x32xf32>
    %119 = arith.addf %117, %118 : vector<2x32xf32>
    %120 = vector.extract_strided_slice %109 {offsets = [0, 64], sizes = [2, 32], strides = [1, 1]} : vector<2x128xf32> to vector<2x32xf32>
    %121 = vector.extract_strided_slice %109 {offsets = [0, 96], sizes = [2, 32], strides = [1, 1]} : vector<2x128xf32> to vector<2x32xf32>
    %cst_48 = arith.constant 5.000000e-01 : f32
    %122 = vector.broadcast %cst_48 : f32 to vector<2x32xf32>
    %123 = arith.mulf %122, %121 : vector<2x32xf32>
    %cst_49 = arith.constant 5.000000e-01 : f32
    %124 = vector.broadcast %cst_49 : f32 to vector<2x32xf32>
    %125 = arith.addf %123, %124 : vector<2x32xf32>
    %126 = arith.mulf %119, %70 : vector<2x32xf32>
    %127 = arith.mulf %114, %120 : vector<2x32xf32>
    %128 = arith.addf %126, %127 : vector<2x32xf32>
    %129 = math.tanh %128 : vector<2x32xf32>
    %130 = arith.mulf %125, %129 : vector<2x32xf32>
    %131 = vector.extract_strided_slice %102 {offsets = [2, 128], sizes = [2, 128], strides = [1, 1]} : vector<4x256xf32> to vector<2x128xf32>
    %132 = arith.addf %99, %131 : vector<2x128xf32>
    %133 = math.tanh %132 : vector<2x128xf32>
    %134 = vector.extract_strided_slice %133 {offsets = [0, 0], sizes = [2, 32], strides = [1, 1]} : vector<2x128xf32> to vector<2x32xf32>
    %cst_50 = arith.constant 5.000000e-01 : f32
    %135 = vector.broadcast %cst_50 : f32 to vector<2x32xf32>
    %136 = arith.mulf %135, %134 : vector<2x32xf32>
    %cst_51 = arith.constant 5.000000e-01 : f32
    %137 = vector.broadcast %cst_51 : f32 to vector<2x32xf32>
    %138 = arith.addf %136, %137 : vector<2x32xf32>
    %139 = vector.extract_strided_slice %133 {offsets = [0, 32], sizes = [2, 32], strides = [1, 1]} : vector<2x128xf32> to vector<2x32xf32>
    %cst_52 = arith.constant 5.000000e-01 : f32
    %140 = vector.broadcast %cst_52 : f32 to vector<2x32xf32>
    %141 = arith.mulf %140, %139 : vector<2x32xf32>
    %cst_53 = arith.constant 5.000000e-01 : f32
    %142 = vector.broadcast %cst_53 : f32 to vector<2x32xf32>
    %143 = arith.addf %141, %142 : vector<2x32xf32>
    %144 = vector.extract_strided_slice %133 {offsets = [0, 64], sizes = [2, 32], strides = [1, 1]} : vector<2x128xf32> to vector<2x32xf32>
    %145 = vector.extract_strided_slice %133 {offsets = [0, 96], sizes = [2, 32], strides = [1, 1]} : vector<2x128xf32> to vector<2x32xf32>
    %cst_54 = arith.constant 5.000000e-01 : f32
    %146 = vector.broadcast %cst_54 : f32 to vector<2x32xf32>
    %147 = arith.mulf %146, %145 : vector<2x32xf32>
    %cst_55 = arith.constant 5.000000e-01 : f32
    %148 = vector.broadcast %cst_55 : f32 to vector<2x32xf32>
    %149 = arith.addf %147, %148 : vector<2x32xf32>
    %150 = arith.mulf %143, %94 : vector<2x32xf32>
    %151 = arith.mulf %138, %144 : vector<2x32xf32>
    %152 = arith.addf %150, %151 : vector<2x32xf32>
    %153 = math.tanh %152 : vector<2x32xf32>
    %154 = arith.mulf %149, %153 : vector<2x32xf32>
    %155 = arith.truncf %130 : vector<2x32xf32> to vector<2x32xbf16>
    %cst_56 = arith.constant dense<0.000000e+00> : vector<2x128xf32>
    %156 = tpu.matmul %155, %0, %cst_56 {dimension_numbers = #tpu.dot_dimension_numbers<[1], [0], [0], [1], [0, 0, 1, 1], [], []>} : vector<2x32xbf16>, vector<32x128xbf16>, vector<2x128xf32> -> vector<2x128xf32>
    %157 = arith.addf %156, %6 : vector<2x128xf32>
    %c3_i32 = arith.constant 3 : i32
    %158 = tpu.concatenate %130, %154 in 0 : vector<2x32xf32>, vector<2x32xf32> -> vector<4x32xf32>
    %159 = arith.truncf %158 : vector<4x32xf32> to vector<4x32xbf16>
    %cst_57 = arith.constant dense<0.000000e+00> : vector<4x256xf32>
    %160 = tpu.matmul %159, %3, %cst_57 {dimension_numbers = #tpu.dot_dimension_numbers<[1], [0], [0], [1], [0, 0, 1, 1], [], []>} : vector<4x32xbf16>, vector<32x256xbf16>, vector<4x256xf32> -> vector<4x256xf32>
    %c2_i32_58 = arith.constant 2 : i32
    %161 = arith.muli %c3_i32, %c2_i32_58 : i32
    %162 = tpu.assume_multiple %161, 2 : i32
    %163 = arith.index_cast %162 : i32 to index
    %c0_59 = arith.constant 0 : index
    %164 = vector.load %arg10[%163, %c0_59] : memref<16x128xf32, #tpu.memory_space<vmem>>, vector<2x128xf32>
    %165 = vector.extract_strided_slice %160 {offsets = [0, 0], sizes = [2, 128], strides = [1, 1]} : vector<4x256xf32> to vector<2x128xf32>
    %166 = arith.addf %164, %165 : vector<2x128xf32>
    %167 = math.tanh %166 : vector<2x128xf32>
    %168 = vector.extract_strided_slice %167 {offsets = [0, 0], sizes = [2, 32], strides = [1, 1]} : vector<2x128xf32> to vector<2x32xf32>
    %cst_60 = arith.constant 5.000000e-01 : f32
    %169 = vector.broadcast %cst_60 : f32 to vector<2x32xf32>
    %170 = arith.mulf %169, %168 : vector<2x32xf32>
    %cst_61 = arith.constant 5.000000e-01 : f32
    %171 = vector.broadcast %cst_61 : f32 to vector<2x32xf32>
    %172 = arith.addf %170, %171 : vector<2x32xf32>
    %173 = vector.extract_strided_slice %167 {offsets = [0, 32], sizes = [2, 32], strides = [1, 1]} : vector<2x128xf32> to vector<2x32xf32>
    %cst_62 = arith.constant 5.000000e-01 : f32
    %174 = vector.broadcast %cst_62 : f32 to vector<2x32xf32>
    %175 = arith.mulf %174, %173 : vector<2x32xf32>
    %cst_63 = arith.constant 5.000000e-01 : f32
    %176 = vector.broadcast %cst_63 : f32 to vector<2x32xf32>
    %177 = arith.addf %175, %176 : vector<2x32xf32>
    %178 = vector.extract_strided_slice %167 {offsets = [0, 64], sizes = [2, 32], strides = [1, 1]} : vector<2x128xf32> to vector<2x32xf32>
    %179 = vector.extract_strided_slice %167 {offsets = [0, 96], sizes = [2, 32], strides = [1, 1]} : vector<2x128xf32> to vector<2x32xf32>
    %cst_64 = arith.constant 5.000000e-01 : f32
    %180 = vector.broadcast %cst_64 : f32 to vector<2x32xf32>
    %181 = arith.mulf %180, %179 : vector<2x32xf32>
    %cst_65 = arith.constant 5.000000e-01 : f32
    %182 = vector.broadcast %cst_65 : f32 to vector<2x32xf32>
    %183 = arith.addf %181, %182 : vector<2x32xf32>
    %184 = arith.mulf %177, %128 : vector<2x32xf32>
    %185 = arith.mulf %172, %178 : vector<2x32xf32>
    %186 = arith.addf %184, %185 : vector<2x32xf32>
    %187 = math.tanh %186 : vector<2x32xf32>
    %188 = arith.mulf %183, %187 : vector<2x32xf32>
    %189 = vector.extract_strided_slice %160 {offsets = [2, 128], sizes = [2, 128], strides = [1, 1]} : vector<4x256xf32> to vector<2x128xf32>
    %190 = arith.addf %157, %189 : vector<2x128xf32>
    %191 = math.tanh %190 : vector<2x128xf32>
    %192 = vector.extract_strided_slice %191 {offsets = [0, 0], sizes = [2, 32], strides = [1, 1]} : vector<2x128xf32> to vector<2x32xf32>
    %cst_66 = arith.constant 5.000000e-01 : f32
    %193 = vector.broadcast %cst_66 : f32 to vector<2x32xf32>
    %194 = arith.mulf %193, %192 : vector<2x32xf32>
    %cst_67 = arith.constant 5.000000e-01 : f32
    %195 = vector.broadcast %cst_67 : f32 to vector<2x32xf32>
    %196 = arith.addf %194, %195 : vector<2x32xf32>
    %197 = vector.extract_strided_slice %191 {offsets = [0, 32], sizes = [2, 32], strides = [1, 1]} : vector<2x128xf32> to vector<2x32xf32>
    %cst_68 = arith.constant 5.000000e-01 : f32
    %198 = vector.broadcast %cst_68 : f32 to vector<2x32xf32>
    %199 = arith.mulf %198, %197 : vector<2x32xf32>
    %cst_69 = arith.constant 5.000000e-01 : f32
    %200 = vector.broadcast %cst_69 : f32 to vector<2x32xf32>
    %201 = arith.addf %199, %200 : vector<2x32xf32>
    %202 = vector.extract_strided_slice %191 {offsets = [0, 64], sizes = [2, 32], strides = [1, 1]} : vector<2x128xf32> to vector<2x32xf32>
    %203 = vector.extract_strided_slice %191 {offsets = [0, 96], sizes = [2, 32], strides = [1, 1]} : vector<2x128xf32> to vector<2x32xf32>
    %cst_70 = arith.constant 5.000000e-01 : f32
    %204 = vector.broadcast %cst_70 : f32 to vector<2x32xf32>
    %205 = arith.mulf %204, %203 : vector<2x32xf32>
    %cst_71 = arith.constant 5.000000e-01 : f32
    %206 = vector.broadcast %cst_71 : f32 to vector<2x32xf32>
    %207 = arith.addf %205, %206 : vector<2x32xf32>
    %208 = arith.mulf %201, %152 : vector<2x32xf32>
    %209 = arith.mulf %196, %202 : vector<2x32xf32>
    %210 = arith.addf %208, %209 : vector<2x32xf32>
    %211 = math.tanh %210 : vector<2x32xf32>
    %212 = arith.mulf %207, %211 : vector<2x32xf32>
    %213 = arith.truncf %188 : vector<2x32xf32> to vector<2x32xbf16>
    %cst_72 = arith.constant dense<0.000000e+00> : vector<2x128xf32>
    %214 = tpu.matmul %213, %0, %cst_72 {dimension_numbers = #tpu.dot_dimension_numbers<[1], [0], [0], [1], [0, 0, 1, 1], [], []>} : vector<2x32xbf16>, vector<32x128xbf16>, vector<2x128xf32> -> vector<2x128xf32>
    %215 = arith.addf %214, %6 : vector<2x128xf32>
    %c4_i32 = arith.constant 4 : i32
    %216 = tpu.concatenate %188, %212 in 0 : vector<2x32xf32>, vector<2x32xf32> -> vector<4x32xf32>
    %217 = arith.truncf %216 : vector<4x32xf32> to vector<4x32xbf16>
    %cst_73 = arith.constant dense<0.000000e+00> : vector<4x256xf32>
    %218 = tpu.matmul %217, %3, %cst_73 {dimension_numbers = #tpu.dot_dimension_numbers<[1], [0], [0], [1], [0, 0, 1, 1], [], []>} : vector<4x32xbf16>, vector<32x256xbf16>, vector<4x256xf32> -> vector<4x256xf32>
    %c2_i32_74 = arith.constant 2 : i32
    %219 = arith.muli %c4_i32, %c2_i32_74 : i32
    %220 = tpu.assume_multiple %219, 2 : i32
    %221 = arith.index_cast %220 : i32 to index
    %c0_75 = arith.constant 0 : index
    %222 = vector.load %arg10[%221, %c0_75] : memref<16x128xf32, #tpu.memory_space<vmem>>, vector<2x128xf32>
    %223 = vector.extract_strided_slice %218 {offsets = [0, 0], sizes = [2, 128], strides = [1, 1]} : vector<4x256xf32> to vector<2x128xf32>
    %224 = arith.addf %222, %223 : vector<2x128xf32>
    %225 = math.tanh %224 : vector<2x128xf32>
    %226 = vector.extract_strided_slice %225 {offsets = [0, 0], sizes = [2, 32], strides = [1, 1]} : vector<2x128xf32> to vector<2x32xf32>
    %cst_76 = arith.constant 5.000000e-01 : f32
    %227 = vector.broadcast %cst_76 : f32 to vector<2x32xf32>
    %228 = arith.mulf %227, %226 : vector<2x32xf32>
    %cst_77 = arith.constant 5.000000e-01 : f32
    %229 = vector.broadcast %cst_77 : f32 to vector<2x32xf32>
    %230 = arith.addf %228, %229 : vector<2x32xf32>
    %231 = vector.extract_strided_slice %225 {offsets = [0, 32], sizes = [2, 32], strides = [1, 1]} : vector<2x128xf32> to vector<2x32xf32>
    %cst_78 = arith.constant 5.000000e-01 : f32
    %232 = vector.broadcast %cst_78 : f32 to vector<2x32xf32>
    %233 = arith.mulf %232, %231 : vector<2x32xf32>
    %cst_79 = arith.constant 5.000000e-01 : f32
    %234 = vector.broadcast %cst_79 : f32 to vector<2x32xf32>
    %235 = arith.addf %233, %234 : vector<2x32xf32>
    %236 = vector.extract_strided_slice %225 {offsets = [0, 64], sizes = [2, 32], strides = [1, 1]} : vector<2x128xf32> to vector<2x32xf32>
    %237 = vector.extract_strided_slice %225 {offsets = [0, 96], sizes = [2, 32], strides = [1, 1]} : vector<2x128xf32> to vector<2x32xf32>
    %cst_80 = arith.constant 5.000000e-01 : f32
    %238 = vector.broadcast %cst_80 : f32 to vector<2x32xf32>
    %239 = arith.mulf %238, %237 : vector<2x32xf32>
    %cst_81 = arith.constant 5.000000e-01 : f32
    %240 = vector.broadcast %cst_81 : f32 to vector<2x32xf32>
    %241 = arith.addf %239, %240 : vector<2x32xf32>
    %242 = arith.mulf %235, %186 : vector<2x32xf32>
    %243 = arith.mulf %230, %236 : vector<2x32xf32>
    %244 = arith.addf %242, %243 : vector<2x32xf32>
    %245 = math.tanh %244 : vector<2x32xf32>
    %246 = arith.mulf %241, %245 : vector<2x32xf32>
    %247 = vector.extract_strided_slice %218 {offsets = [2, 128], sizes = [2, 128], strides = [1, 1]} : vector<4x256xf32> to vector<2x128xf32>
    %248 = arith.addf %215, %247 : vector<2x128xf32>
    %249 = math.tanh %248 : vector<2x128xf32>
    %250 = vector.extract_strided_slice %249 {offsets = [0, 0], sizes = [2, 32], strides = [1, 1]} : vector<2x128xf32> to vector<2x32xf32>
    %cst_82 = arith.constant 5.000000e-01 : f32
    %251 = vector.broadcast %cst_82 : f32 to vector<2x32xf32>
    %252 = arith.mulf %251, %250 : vector<2x32xf32>
    %cst_83 = arith.constant 5.000000e-01 : f32
    %253 = vector.broadcast %cst_83 : f32 to vector<2x32xf32>
    %254 = arith.addf %252, %253 : vector<2x32xf32>
    %255 = vector.extract_strided_slice %249 {offsets = [0, 32], sizes = [2, 32], strides = [1, 1]} : vector<2x128xf32> to vector<2x32xf32>
    %cst_84 = arith.constant 5.000000e-01 : f32
    %256 = vector.broadcast %cst_84 : f32 to vector<2x32xf32>
    %257 = arith.mulf %256, %255 : vector<2x32xf32>
    %cst_85 = arith.constant 5.000000e-01 : f32
    %258 = vector.broadcast %cst_85 : f32 to vector<2x32xf32>
    %259 = arith.addf %257, %258 : vector<2x32xf32>
    %260 = vector.extract_strided_slice %249 {offsets = [0, 64], sizes = [2, 32], strides = [1, 1]} : vector<2x128xf32> to vector<2x32xf32>
    %261 = vector.extract_strided_slice %249 {offsets = [0, 96], sizes = [2, 32], strides = [1, 1]} : vector<2x128xf32> to vector<2x32xf32>
    %cst_86 = arith.constant 5.000000e-01 : f32
    %262 = vector.broadcast %cst_86 : f32 to vector<2x32xf32>
    %263 = arith.mulf %262, %261 : vector<2x32xf32>
    %cst_87 = arith.constant 5.000000e-01 : f32
    %264 = vector.broadcast %cst_87 : f32 to vector<2x32xf32>
    %265 = arith.addf %263, %264 : vector<2x32xf32>
    %266 = arith.mulf %259, %210 : vector<2x32xf32>
    %267 = arith.mulf %254, %260 : vector<2x32xf32>
    %268 = arith.addf %266, %267 : vector<2x32xf32>
    %269 = math.tanh %268 : vector<2x32xf32>
    %270 = arith.mulf %265, %269 : vector<2x32xf32>
    %271 = arith.truncf %246 : vector<2x32xf32> to vector<2x32xbf16>
    %cst_88 = arith.constant dense<0.000000e+00> : vector<2x128xf32>
    %272 = tpu.matmul %271, %0, %cst_88 {dimension_numbers = #tpu.dot_dimension_numbers<[1], [0], [0], [1], [0, 0, 1, 1], [], []>} : vector<2x32xbf16>, vector<32x128xbf16>, vector<2x128xf32> -> vector<2x128xf32>
    %273 = arith.addf %272, %6 : vector<2x128xf32>
    %c5_i32 = arith.constant 5 : i32
    %274 = tpu.concatenate %246, %270 in 0 : vector<2x32xf32>, vector<2x32xf32> -> vector<4x32xf32>
    %275 = arith.truncf %274 : vector<4x32xf32> to vector<4x32xbf16>
    %cst_89 = arith.constant dense<0.000000e+00> : vector<4x256xf32>
    %276 = tpu.matmul %275, %3, %cst_89 {dimension_numbers = #tpu.dot_dimension_numbers<[1], [0], [0], [1], [0, 0, 1, 1], [], []>} : vector<4x32xbf16>, vector<32x256xbf16>, vector<4x256xf32> -> vector<4x256xf32>
    %c2_i32_90 = arith.constant 2 : i32
    %277 = arith.muli %c5_i32, %c2_i32_90 : i32
    %278 = tpu.assume_multiple %277, 2 : i32
    %279 = arith.index_cast %278 : i32 to index
    %c0_91 = arith.constant 0 : index
    %280 = vector.load %arg10[%279, %c0_91] : memref<16x128xf32, #tpu.memory_space<vmem>>, vector<2x128xf32>
    %281 = vector.extract_strided_slice %276 {offsets = [0, 0], sizes = [2, 128], strides = [1, 1]} : vector<4x256xf32> to vector<2x128xf32>
    %282 = arith.addf %280, %281 : vector<2x128xf32>
    %283 = math.tanh %282 : vector<2x128xf32>
    %284 = vector.extract_strided_slice %283 {offsets = [0, 0], sizes = [2, 32], strides = [1, 1]} : vector<2x128xf32> to vector<2x32xf32>
    %cst_92 = arith.constant 5.000000e-01 : f32
    %285 = vector.broadcast %cst_92 : f32 to vector<2x32xf32>
    %286 = arith.mulf %285, %284 : vector<2x32xf32>
    %cst_93 = arith.constant 5.000000e-01 : f32
    %287 = vector.broadcast %cst_93 : f32 to vector<2x32xf32>
    %288 = arith.addf %286, %287 : vector<2x32xf32>
    %289 = vector.extract_strided_slice %283 {offsets = [0, 32], sizes = [2, 32], strides = [1, 1]} : vector<2x128xf32> to vector<2x32xf32>
    %cst_94 = arith.constant 5.000000e-01 : f32
    %290 = vector.broadcast %cst_94 : f32 to vector<2x32xf32>
    %291 = arith.mulf %290, %289 : vector<2x32xf32>
    %cst_95 = arith.constant 5.000000e-01 : f32
    %292 = vector.broadcast %cst_95 : f32 to vector<2x32xf32>
    %293 = arith.addf %291, %292 : vector<2x32xf32>
    %294 = vector.extract_strided_slice %283 {offsets = [0, 64], sizes = [2, 32], strides = [1, 1]} : vector<2x128xf32> to vector<2x32xf32>
    %295 = vector.extract_strided_slice %283 {offsets = [0, 96], sizes = [2, 32], strides = [1, 1]} : vector<2x128xf32> to vector<2x32xf32>
    %cst_96 = arith.constant 5.000000e-01 : f32
    %296 = vector.broadcast %cst_96 : f32 to vector<2x32xf32>
    %297 = arith.mulf %296, %295 : vector<2x32xf32>
    %cst_97 = arith.constant 5.000000e-01 : f32
    %298 = vector.broadcast %cst_97 : f32 to vector<2x32xf32>
    %299 = arith.addf %297, %298 : vector<2x32xf32>
    %300 = arith.mulf %293, %244 : vector<2x32xf32>
    %301 = arith.mulf %288, %294 : vector<2x32xf32>
    %302 = arith.addf %300, %301 : vector<2x32xf32>
    %303 = math.tanh %302 : vector<2x32xf32>
    %304 = arith.mulf %299, %303 : vector<2x32xf32>
    %305 = vector.extract_strided_slice %276 {offsets = [2, 128], sizes = [2, 128], strides = [1, 1]} : vector<4x256xf32> to vector<2x128xf32>
    %306 = arith.addf %273, %305 : vector<2x128xf32>
    %307 = math.tanh %306 : vector<2x128xf32>
    %308 = vector.extract_strided_slice %307 {offsets = [0, 0], sizes = [2, 32], strides = [1, 1]} : vector<2x128xf32> to vector<2x32xf32>
    %cst_98 = arith.constant 5.000000e-01 : f32
    %309 = vector.broadcast %cst_98 : f32 to vector<2x32xf32>
    %310 = arith.mulf %309, %308 : vector<2x32xf32>
    %cst_99 = arith.constant 5.000000e-01 : f32
    %311 = vector.broadcast %cst_99 : f32 to vector<2x32xf32>
    %312 = arith.addf %310, %311 : vector<2x32xf32>
    %313 = vector.extract_strided_slice %307 {offsets = [0, 32], sizes = [2, 32], strides = [1, 1]} : vector<2x128xf32> to vector<2x32xf32>
    %cst_100 = arith.constant 5.000000e-01 : f32
    %314 = vector.broadcast %cst_100 : f32 to vector<2x32xf32>
    %315 = arith.mulf %314, %313 : vector<2x32xf32>
    %cst_101 = arith.constant 5.000000e-01 : f32
    %316 = vector.broadcast %cst_101 : f32 to vector<2x32xf32>
    %317 = arith.addf %315, %316 : vector<2x32xf32>
    %318 = vector.extract_strided_slice %307 {offsets = [0, 64], sizes = [2, 32], strides = [1, 1]} : vector<2x128xf32> to vector<2x32xf32>
    %319 = vector.extract_strided_slice %307 {offsets = [0, 96], sizes = [2, 32], strides = [1, 1]} : vector<2x128xf32> to vector<2x32xf32>
    %cst_102 = arith.constant 5.000000e-01 : f32
    %320 = vector.broadcast %cst_102 : f32 to vector<2x32xf32>
    %321 = arith.mulf %320, %319 : vector<2x32xf32>
    %cst_103 = arith.constant 5.000000e-01 : f32
    %322 = vector.broadcast %cst_103 : f32 to vector<2x32xf32>
    %323 = arith.addf %321, %322 : vector<2x32xf32>
    %324 = arith.mulf %317, %268 : vector<2x32xf32>
    %325 = arith.mulf %312, %318 : vector<2x32xf32>
    %326 = arith.addf %324, %325 : vector<2x32xf32>
    %327 = math.tanh %326 : vector<2x32xf32>
    %328 = arith.mulf %323, %327 : vector<2x32xf32>
    %329 = arith.truncf %304 : vector<2x32xf32> to vector<2x32xbf16>
    %cst_104 = arith.constant dense<0.000000e+00> : vector<2x128xf32>
    %330 = tpu.matmul %329, %0, %cst_104 {dimension_numbers = #tpu.dot_dimension_numbers<[1], [0], [0], [1], [0, 0, 1, 1], [], []>} : vector<2x32xbf16>, vector<32x128xbf16>, vector<2x128xf32> -> vector<2x128xf32>
    %331 = arith.addf %330, %6 : vector<2x128xf32>
    %c6_i32 = arith.constant 6 : i32
    %332 = tpu.concatenate %304, %328 in 0 : vector<2x32xf32>, vector<2x32xf32> -> vector<4x32xf32>
    %333 = arith.truncf %332 : vector<4x32xf32> to vector<4x32xbf16>
    %cst_105 = arith.constant dense<0.000000e+00> : vector<4x256xf32>
    %334 = tpu.matmul %333, %3, %cst_105 {dimension_numbers = #tpu.dot_dimension_numbers<[1], [0], [0], [1], [0, 0, 1, 1], [], []>} : vector<4x32xbf16>, vector<32x256xbf16>, vector<4x256xf32> -> vector<4x256xf32>
    %c2_i32_106 = arith.constant 2 : i32
    %335 = arith.muli %c6_i32, %c2_i32_106 : i32
    %336 = tpu.assume_multiple %335, 2 : i32
    %337 = arith.index_cast %336 : i32 to index
    %c0_107 = arith.constant 0 : index
    %338 = vector.load %arg10[%337, %c0_107] : memref<16x128xf32, #tpu.memory_space<vmem>>, vector<2x128xf32>
    %339 = vector.extract_strided_slice %334 {offsets = [0, 0], sizes = [2, 128], strides = [1, 1]} : vector<4x256xf32> to vector<2x128xf32>
    %340 = arith.addf %338, %339 : vector<2x128xf32>
    %341 = math.tanh %340 : vector<2x128xf32>
    %342 = vector.extract_strided_slice %341 {offsets = [0, 0], sizes = [2, 32], strides = [1, 1]} : vector<2x128xf32> to vector<2x32xf32>
    %cst_108 = arith.constant 5.000000e-01 : f32
    %343 = vector.broadcast %cst_108 : f32 to vector<2x32xf32>
    %344 = arith.mulf %343, %342 : vector<2x32xf32>
    %cst_109 = arith.constant 5.000000e-01 : f32
    %345 = vector.broadcast %cst_109 : f32 to vector<2x32xf32>
    %346 = arith.addf %344, %345 : vector<2x32xf32>
    %347 = vector.extract_strided_slice %341 {offsets = [0, 32], sizes = [2, 32], strides = [1, 1]} : vector<2x128xf32> to vector<2x32xf32>
    %cst_110 = arith.constant 5.000000e-01 : f32
    %348 = vector.broadcast %cst_110 : f32 to vector<2x32xf32>
    %349 = arith.mulf %348, %347 : vector<2x32xf32>
    %cst_111 = arith.constant 5.000000e-01 : f32
    %350 = vector.broadcast %cst_111 : f32 to vector<2x32xf32>
    %351 = arith.addf %349, %350 : vector<2x32xf32>
    %352 = vector.extract_strided_slice %341 {offsets = [0, 64], sizes = [2, 32], strides = [1, 1]} : vector<2x128xf32> to vector<2x32xf32>
    %353 = vector.extract_strided_slice %341 {offsets = [0, 96], sizes = [2, 32], strides = [1, 1]} : vector<2x128xf32> to vector<2x32xf32>
    %cst_112 = arith.constant 5.000000e-01 : f32
    %354 = vector.broadcast %cst_112 : f32 to vector<2x32xf32>
    %355 = arith.mulf %354, %353 : vector<2x32xf32>
    %cst_113 = arith.constant 5.000000e-01 : f32
    %356 = vector.broadcast %cst_113 : f32 to vector<2x32xf32>
    %357 = arith.addf %355, %356 : vector<2x32xf32>
    %358 = arith.mulf %351, %302 : vector<2x32xf32>
    %359 = arith.mulf %346, %352 : vector<2x32xf32>
    %360 = arith.addf %358, %359 : vector<2x32xf32>
    %361 = math.tanh %360 : vector<2x32xf32>
    %362 = arith.mulf %357, %361 : vector<2x32xf32>
    %363 = vector.extract_strided_slice %334 {offsets = [2, 128], sizes = [2, 128], strides = [1, 1]} : vector<4x256xf32> to vector<2x128xf32>
    %364 = arith.addf %331, %363 : vector<2x128xf32>
    %365 = math.tanh %364 : vector<2x128xf32>
    %366 = vector.extract_strided_slice %365 {offsets = [0, 0], sizes = [2, 32], strides = [1, 1]} : vector<2x128xf32> to vector<2x32xf32>
    %cst_114 = arith.constant 5.000000e-01 : f32
    %367 = vector.broadcast %cst_114 : f32 to vector<2x32xf32>
    %368 = arith.mulf %367, %366 : vector<2x32xf32>
    %cst_115 = arith.constant 5.000000e-01 : f32
    %369 = vector.broadcast %cst_115 : f32 to vector<2x32xf32>
    %370 = arith.addf %368, %369 : vector<2x32xf32>
    %371 = vector.extract_strided_slice %365 {offsets = [0, 32], sizes = [2, 32], strides = [1, 1]} : vector<2x128xf32> to vector<2x32xf32>
    %cst_116 = arith.constant 5.000000e-01 : f32
    %372 = vector.broadcast %cst_116 : f32 to vector<2x32xf32>
    %373 = arith.mulf %372, %371 : vector<2x32xf32>
    %cst_117 = arith.constant 5.000000e-01 : f32
    %374 = vector.broadcast %cst_117 : f32 to vector<2x32xf32>
    %375 = arith.addf %373, %374 : vector<2x32xf32>
    %376 = vector.extract_strided_slice %365 {offsets = [0, 64], sizes = [2, 32], strides = [1, 1]} : vector<2x128xf32> to vector<2x32xf32>
    %377 = vector.extract_strided_slice %365 {offsets = [0, 96], sizes = [2, 32], strides = [1, 1]} : vector<2x128xf32> to vector<2x32xf32>
    %cst_118 = arith.constant 5.000000e-01 : f32
    %378 = vector.broadcast %cst_118 : f32 to vector<2x32xf32>
    %379 = arith.mulf %378, %377 : vector<2x32xf32>
    %cst_119 = arith.constant 5.000000e-01 : f32
    %380 = vector.broadcast %cst_119 : f32 to vector<2x32xf32>
    %381 = arith.addf %379, %380 : vector<2x32xf32>
    %382 = arith.mulf %375, %326 : vector<2x32xf32>
    %383 = arith.mulf %370, %376 : vector<2x32xf32>
    %384 = arith.addf %382, %383 : vector<2x32xf32>
    %385 = math.tanh %384 : vector<2x32xf32>
    %386 = arith.mulf %381, %385 : vector<2x32xf32>
    %387 = arith.truncf %362 : vector<2x32xf32> to vector<2x32xbf16>
    %cst_120 = arith.constant dense<0.000000e+00> : vector<2x128xf32>
    %388 = tpu.matmul %387, %0, %cst_120 {dimension_numbers = #tpu.dot_dimension_numbers<[1], [0], [0], [1], [0, 0, 1, 1], [], []>} : vector<2x32xbf16>, vector<32x128xbf16>, vector<2x128xf32> -> vector<2x128xf32>
    %389 = arith.addf %388, %6 : vector<2x128xf32>
    %c7_i32 = arith.constant 7 : i32
    %390 = tpu.concatenate %362, %386 in 0 : vector<2x32xf32>, vector<2x32xf32> -> vector<4x32xf32>
    %391 = arith.truncf %390 : vector<4x32xf32> to vector<4x32xbf16>
    %cst_121 = arith.constant dense<0.000000e+00> : vector<4x256xf32>
    %392 = tpu.matmul %391, %3, %cst_121 {dimension_numbers = #tpu.dot_dimension_numbers<[1], [0], [0], [1], [0, 0, 1, 1], [], []>} : vector<4x32xbf16>, vector<32x256xbf16>, vector<4x256xf32> -> vector<4x256xf32>
    %c2_i32_122 = arith.constant 2 : i32
    %393 = arith.muli %c7_i32, %c2_i32_122 : i32
    %394 = tpu.assume_multiple %393, 2 : i32
    %395 = arith.index_cast %394 : i32 to index
    %c0_123 = arith.constant 0 : index
    %396 = vector.load %arg10[%395, %c0_123] : memref<16x128xf32, #tpu.memory_space<vmem>>, vector<2x128xf32>
    %397 = vector.extract_strided_slice %392 {offsets = [0, 0], sizes = [2, 128], strides = [1, 1]} : vector<4x256xf32> to vector<2x128xf32>
    %398 = arith.addf %396, %397 : vector<2x128xf32>
    %399 = math.tanh %398 : vector<2x128xf32>
    %400 = vector.extract_strided_slice %399 {offsets = [0, 0], sizes = [2, 32], strides = [1, 1]} : vector<2x128xf32> to vector<2x32xf32>
    %cst_124 = arith.constant 5.000000e-01 : f32
    %401 = vector.broadcast %cst_124 : f32 to vector<2x32xf32>
    %402 = arith.mulf %401, %400 : vector<2x32xf32>
    %cst_125 = arith.constant 5.000000e-01 : f32
    %403 = vector.broadcast %cst_125 : f32 to vector<2x32xf32>
    %404 = arith.addf %402, %403 : vector<2x32xf32>
    %405 = vector.extract_strided_slice %399 {offsets = [0, 32], sizes = [2, 32], strides = [1, 1]} : vector<2x128xf32> to vector<2x32xf32>
    %cst_126 = arith.constant 5.000000e-01 : f32
    %406 = vector.broadcast %cst_126 : f32 to vector<2x32xf32>
    %407 = arith.mulf %406, %405 : vector<2x32xf32>
    %cst_127 = arith.constant 5.000000e-01 : f32
    %408 = vector.broadcast %cst_127 : f32 to vector<2x32xf32>
    %409 = arith.addf %407, %408 : vector<2x32xf32>
    %410 = vector.extract_strided_slice %399 {offsets = [0, 64], sizes = [2, 32], strides = [1, 1]} : vector<2x128xf32> to vector<2x32xf32>
    %411 = vector.extract_strided_slice %399 {offsets = [0, 96], sizes = [2, 32], strides = [1, 1]} : vector<2x128xf32> to vector<2x32xf32>
    %cst_128 = arith.constant 5.000000e-01 : f32
    %412 = vector.broadcast %cst_128 : f32 to vector<2x32xf32>
    %413 = arith.mulf %412, %411 : vector<2x32xf32>
    %cst_129 = arith.constant 5.000000e-01 : f32
    %414 = vector.broadcast %cst_129 : f32 to vector<2x32xf32>
    %415 = arith.addf %413, %414 : vector<2x32xf32>
    %416 = arith.mulf %409, %360 : vector<2x32xf32>
    %417 = arith.mulf %404, %410 : vector<2x32xf32>
    %418 = arith.addf %416, %417 : vector<2x32xf32>
    %419 = math.tanh %418 : vector<2x32xf32>
    %420 = arith.mulf %415, %419 : vector<2x32xf32>
    %421 = vector.extract_strided_slice %392 {offsets = [2, 128], sizes = [2, 128], strides = [1, 1]} : vector<4x256xf32> to vector<2x128xf32>
    %422 = arith.addf %389, %421 : vector<2x128xf32>
    %423 = math.tanh %422 : vector<2x128xf32>
    %424 = vector.extract_strided_slice %423 {offsets = [0, 0], sizes = [2, 32], strides = [1, 1]} : vector<2x128xf32> to vector<2x32xf32>
    %cst_130 = arith.constant 5.000000e-01 : f32
    %425 = vector.broadcast %cst_130 : f32 to vector<2x32xf32>
    %426 = arith.mulf %425, %424 : vector<2x32xf32>
    %cst_131 = arith.constant 5.000000e-01 : f32
    %427 = vector.broadcast %cst_131 : f32 to vector<2x32xf32>
    %428 = arith.addf %426, %427 : vector<2x32xf32>
    %429 = vector.extract_strided_slice %423 {offsets = [0, 32], sizes = [2, 32], strides = [1, 1]} : vector<2x128xf32> to vector<2x32xf32>
    %cst_132 = arith.constant 5.000000e-01 : f32
    %430 = vector.broadcast %cst_132 : f32 to vector<2x32xf32>
    %431 = arith.mulf %430, %429 : vector<2x32xf32>
    %cst_133 = arith.constant 5.000000e-01 : f32
    %432 = vector.broadcast %cst_133 : f32 to vector<2x32xf32>
    %433 = arith.addf %431, %432 : vector<2x32xf32>
    %434 = vector.extract_strided_slice %423 {offsets = [0, 64], sizes = [2, 32], strides = [1, 1]} : vector<2x128xf32> to vector<2x32xf32>
    %435 = vector.extract_strided_slice %423 {offsets = [0, 96], sizes = [2, 32], strides = [1, 1]} : vector<2x128xf32> to vector<2x32xf32>
    %cst_134 = arith.constant 5.000000e-01 : f32
    %436 = vector.broadcast %cst_134 : f32 to vector<2x32xf32>
    %437 = arith.mulf %436, %435 : vector<2x32xf32>
    %cst_135 = arith.constant 5.000000e-01 : f32
    %438 = vector.broadcast %cst_135 : f32 to vector<2x32xf32>
    %439 = arith.addf %437, %438 : vector<2x32xf32>
    %440 = arith.mulf %433, %384 : vector<2x32xf32>
    %441 = arith.mulf %428, %434 : vector<2x32xf32>
    %442 = arith.addf %440, %441 : vector<2x32xf32>
    %443 = math.tanh %442 : vector<2x32xf32>
    %444 = arith.mulf %439, %443 : vector<2x32xf32>
    %445 = arith.truncf %420 : vector<2x32xf32> to vector<2x32xbf16>
    %cst_136 = arith.constant dense<0.000000e+00> : vector<2x128xf32>
    %446 = tpu.matmul %445, %0, %cst_136 {dimension_numbers = #tpu.dot_dimension_numbers<[1], [0], [0], [1], [0, 0, 1, 1], [], []>} : vector<2x32xbf16>, vector<32x128xbf16>, vector<2x128xf32> -> vector<2x128xf32>
    %447 = arith.addf %446, %6 : vector<2x128xf32>
    %c7_i32_137 = arith.constant 7 : i32
    %448 = arith.truncf %444 : vector<2x32xf32> to vector<2x32xbf16>
    %c0_138 = arith.constant 0 : index
    %c0_139 = arith.constant 0 : index
    %449 = vector.load %arg5[%c0_138, %c0_139] : memref<32x128xbf16, #tpu.memory_space<vmem>>, vector<32x128xbf16>
    %cst_140 = arith.constant dense<0.000000e+00> : vector<2x128xf32>
    %450 = tpu.matmul %448, %449, %cst_140 {dimension_numbers = #tpu.dot_dimension_numbers<[1], [0], [0], [1], [0, 0, 1, 1], [], []>} : vector<2x32xbf16>, vector<32x128xbf16>, vector<2x128xf32> -> vector<2x128xf32>
    %451 = arith.addf %447, %450 : vector<2x128xf32>
    %452 = math.tanh %451 : vector<2x128xf32>
    %453 = vector.extract_strided_slice %452 {offsets = [0, 0], sizes = [2, 32], strides = [1, 1]} : vector<2x128xf32> to vector<2x32xf32>
    %cst_141 = arith.constant 5.000000e-01 : f32
    %454 = vector.broadcast %cst_141 : f32 to vector<2x32xf32>
    %455 = arith.mulf %454, %453 : vector<2x32xf32>
    %cst_142 = arith.constant 5.000000e-01 : f32
    %456 = vector.broadcast %cst_142 : f32 to vector<2x32xf32>
    %457 = arith.addf %455, %456 : vector<2x32xf32>
    %458 = vector.extract_strided_slice %452 {offsets = [0, 32], sizes = [2, 32], strides = [1, 1]} : vector<2x128xf32> to vector<2x32xf32>
    %cst_143 = arith.constant 5.000000e-01 : f32
    %459 = vector.broadcast %cst_143 : f32 to vector<2x32xf32>
    %460 = arith.mulf %459, %458 : vector<2x32xf32>
    %cst_144 = arith.constant 5.000000e-01 : f32
    %461 = vector.broadcast %cst_144 : f32 to vector<2x32xf32>
    %462 = arith.addf %460, %461 : vector<2x32xf32>
    %463 = vector.extract_strided_slice %452 {offsets = [0, 64], sizes = [2, 32], strides = [1, 1]} : vector<2x128xf32> to vector<2x32xf32>
    %464 = vector.extract_strided_slice %452 {offsets = [0, 96], sizes = [2, 32], strides = [1, 1]} : vector<2x128xf32> to vector<2x32xf32>
    %cst_145 = arith.constant 5.000000e-01 : f32
    %465 = vector.broadcast %cst_145 : f32 to vector<2x32xf32>
    %466 = arith.mulf %465, %464 : vector<2x32xf32>
    %cst_146 = arith.constant 5.000000e-01 : f32
    %467 = vector.broadcast %cst_146 : f32 to vector<2x32xf32>
    %468 = arith.addf %466, %467 : vector<2x32xf32>
    %469 = arith.mulf %462, %442 : vector<2x32xf32>
    %470 = arith.mulf %457, %463 : vector<2x32xf32>
    %471 = arith.addf %469, %470 : vector<2x32xf32>
    %472 = math.tanh %471 : vector<2x32xf32>
    %473 = arith.mulf %468, %472 : vector<2x32xf32>
    %474 = arith.truncf %473 : vector<2x32xf32> to vector<2x32xbf16>
    %c0_147 = arith.constant 0 : index
    %c0_148 = arith.constant 0 : index
    %475 = vector.load %arg7[%c0_147, %c0_148] : memref<32x36xbf16, #tpu.memory_space<vmem>>, vector<32x36xbf16>
    %cst_149 = arith.constant dense<0.000000e+00> : vector<2x36xf32>
    %476 = tpu.matmul %474, %475, %cst_149 {dimension_numbers = #tpu.dot_dimension_numbers<[1], [0], [0], [1], [0, 0, 1, 1], [], []>} : vector<2x32xbf16>, vector<32x36xbf16>, vector<2x36xf32> -> vector<2x36xf32>
    %c0_150 = arith.constant 0 : index
    %c0_151 = arith.constant 0 : index
    %477 = vector.load %arg8[%c0_150, %c0_151] : memref<1x36xf32, #tpu.memory_space<vmem>>, vector<1x36xf32>
    %478 = vector.broadcast %477 : vector<1x36xf32> to vector<2x36xf32>
    %479 = arith.addf %476, %478 : vector<2x36xf32>
    %c0_152 = arith.constant 0 : index
    %c0_153 = arith.constant 0 : index
    %480 = vector.load %arg9[%c0_152, %c0_153] : memref<2x36xf32, #tpu.memory_space<vmem>>, vector<2x36xf32>
    tpu.vector_store %arg9[%c0_152, %c0_153], %479 {strides = array<i32>} : memref<2x36xf32, #tpu.memory_space<vmem>>, vector<2x36xf32>,
    return
  }
}

</mosaic_0001>

<llo_original>
// kernel: tpu_custom_call.1
$region0: #{tpu_custom_call.1}
  #allocation0 [shape = 'u32[]', space=smem, size = 0x4, offset = 0x4, fixed_abs, tag = 'smem constant byte address 0x4 - core index']
  #allocation1 [shape = 'u32[144,128]{1,0:T(1,128)}', space=vmem, size = 0x12000, scoped, tag = 'internal scratch']
  #allocation2 [shape = 'f32[16,128]{1,0:T(8,128)}', space=vmem, size = 0x2000, scoped, tag = 'scratch operand']
  %s0 = inlined_call_operand.vmem [shape: f32[16,6], index: 0, kind: input, shape index: {}]
  %s1 = inlined_call_operand.hbm [shape: bf16[6,128], index: 1, kind: input, shape index: {}]
  %s2 = inlined_call_operand.vmem [shape: bf16[32,128], index: 2, kind: input, shape index: {}]
  %s3 = inlined_call_operand.vmem [shape: f32[1,128], index: 3, kind: input, shape index: {}]
  %s4 = inlined_call_operand.vmem [shape: bf16[32,128], index: 4, kind: input, shape index: {}]
  %s5 = inlined_call_operand.hbm [shape: bf16[32,128], index: 5, kind: input, shape index: {}]
  %s6 = inlined_call_operand.vmem [shape: f32[1,128], index: 6, kind: input, shape index: {}]
  %s7 = inlined_call_operand.vmem [shape: bf16[32,36], index: 7, kind: input, shape index: {}]
  %s8 = inlined_call_operand.vmem [shape: f32[1,36], index: 8, kind: input, shape index: {}]
  %s9 = inlined_call_operand.hbm [shape: f32[2,36], index: 9, kind: output, shape index: {}]
  %s10 = sld [smem:[#allocation0]]
  $region54: #{tpu_custom_call.1} parent=0
    _
  %s12 = ssub.s32 1, %s10
  %s13 = scalar_select 0, %s12, %s10
  $region1: #{tpu_custom_call.1} parent=0
    #allocation3 [shape = 'u8[2048]{0}', space=vmem, size = 0x800, scoped, tag = 'input window, operand 1, single buffered']
    #allocation4 [shape = 's32[1]{0}', space=sflag, size = 0x4, scoped, tag = 'scoped memory for tpu_custom_call.1']
    #allocation5 [shape = 's32[1]{0}', space=sflag, size = 0x4, scoped, tag = 'scoped memory for tpu_custom_call.1']
    #allocation6 [shape = 'u8[8192]{0}', space=vmem, size = 0x2000, scoped, tag = 'input window, operand 5, single buffered']
    #allocation7 [shape = 's32[1]{0}', space=sflag, size = 0x4, scoped, tag = 'scoped memory for tpu_custom_call.1']
    #allocation8 [shape = 'u8[1024]{0}', space=vmem, size = 0x400, scoped, tag = 'output window, operand 0, single buffered']
    %14 = vsyncpa [#allocation4], 0
    %15 = vsyncpa [#allocation7], 0
    %16 = vsyncpa [#allocation5], 0
    // Predicated region
    $region2: #{tpu_custom_call.1} parent=1 // pred_check
      _
    $region3: #{tpu_custom_call.1} parent=1 // pred_check_branch
      %18 = sbr.rel (0) target = $region5
    $region4: #{tpu_custom_call.1} parent=1 // pred_region
      _
    $region5: #{tpu_custom_call.1} parent=1 // pred_fallthru
      _
    // Predicated region
    $region6: #{tpu_custom_call.1} parent=1 // pred_check
      _
    $region7: #{tpu_custom_call.1} parent=1 // pred_check_branch
      %20 = sbr.rel (0) target = $region9
    $region8: #{tpu_custom_call.1} parent=1 // pred_region
      %s22 = ssub.s32 64, 64
      %23 = vsyncadd [#allocation4], %s22
      %s25 = sshll.u32 [#allocation3], 4
      %s26 = int_to_ptr.vmem [resolvable:$true] %s25
      %28 = dma.hbm_to_vmem [thread:$0]  %s1, 64, %s26, [#allocation4]
    $region9: #{tpu_custom_call.1} parent=1 // pred_fallthru
      _
    // Predicated region
    $region10: #{tpu_custom_call.1} parent=1 // pred_check
      _
    $region11: #{tpu_custom_call.1} parent=1 // pred_check_branch
      %30 = sbr.rel (0) target = $region13
    $region12: #{tpu_custom_call.1} parent=1 // pred_region
      _
    $region13: #{tpu_custom_call.1} parent=1 // pred_fallthru
      _
    // Predicated region
    $region14: #{tpu_custom_call.1} parent=1 // pred_check
      _
    $region15: #{tpu_custom_call.1} parent=1 // pred_check_branch
      %32 = sbr.rel (0) target = $region17
    $region16: #{tpu_custom_call.1} parent=1 // pred_region
      _
    $region17: #{tpu_custom_call.1} parent=1 // pred_fallthru
      _
    // Predicated region
    $region18: #{tpu_custom_call.1} parent=1 // pred_check
      _
    $region19: #{tpu_custom_call.1} parent=1 // pred_check_branch
      %34 = sbr.rel (0) target = $region21
    $region20: #{tpu_custom_call.1} parent=1 // pred_region
      _
    $region21: #{tpu_custom_call.1} parent=1 // pred_fallthru
      _
    // Predicated region
    $region22: #{tpu_custom_call.1} parent=1 // pred_check
      _
    $region23: #{tpu_custom_call.1} parent=1 // pred_check_branch
      %36 = sbr.rel (0) target = $region25
    $region24: #{tpu_custom_call.1} parent=1 // pred_region
      %s38 = ssub.s32 256, 256
      %39 = vsyncadd [#allocation7], %s38
      %s40 = sshll.u32 [#allocation6], 4
      %s41 = int_to_ptr.vmem [resolvable:$true] %s40
      %46 = dma.hbm_to_vmem [thread:$0]  %s5, 256, %s41, [#allocation7], 64, 64, 4
    $region25: #{tpu_custom_call.1} parent=1 // pred_fallthru
      _
    // Predicated region
    $region26: #{tpu_custom_call.1} parent=1 // pred_check
      _
    $region27: #{tpu_custom_call.1} parent=1 // pred_check_branch
      %48 = sbr.rel (0) target = $region29
    $region28: #{tpu_custom_call.1} parent=1 // pred_region
      _
    $region29: #{tpu_custom_call.1} parent=1 // pred_fallthru
      _
    // Predicated region
    $region30: #{tpu_custom_call.1} parent=1 // pred_check
      _
    $region31: #{tpu_custom_call.1} parent=1 // pred_check_branch
      %50 = sbr.rel (0) target = $region33
    $region32: #{tpu_custom_call.1} parent=1 // pred_region
      _
    $region33: #{tpu_custom_call.1} parent=1 // pred_fallthru
      _
    // Predicated region
    $region34: #{tpu_custom_call.1} parent=1 // pred_check
      _
    $region35: #{tpu_custom_call.1} parent=1 // pred_check_branch
      %52 = sbr.rel (0) target = $region37
    $region36: #{tpu_custom_call.1} parent=1 // pred_region
      _
    $region37: #{tpu_custom_call.1} parent=1 // pred_fallthru
      _
    // Predicated region
    $region38: #{tpu_custom_call.1} parent=1 // pred_check
      _
    $region39: #{tpu_custom_call.1} parent=1 // pred_check_branch
      %54 = sbr.rel (0) target = $region41
    $region40: #{tpu_custom_call.1} parent=1 // pred_region
      %55 = dma.done [#allocation4], 64
    $region41: #{tpu_custom_call.1} parent=1 // pred_fallthru
      _
    // Predicated region
    $region42: #{tpu_custom_call.1} parent=1 // pred_check
      _
    $region43: #{tpu_custom_call.1} parent=1 // pred_check_branch
      %57 = sbr.rel (0) target = $region45
    $region44: #{tpu_custom_call.1} parent=1 // pred_region
      %58 = dma.done [#allocation7], 256
    $region45: #{tpu_custom_call.1} parent=1 // pred_fallthru
      _
    %v60 = vld [vmem:[%s4] sm:$0xf]
    %v61 = vld [vmem:[%s4 + $0x4] sm:$0xf]
    %v62 = vld [vmem:[%s4 + $0x8] sm:$0xf]
    %v63 = vld [vmem:[%s4 + $0xc] sm:$0xf]
    %v64 = vld [vmem:[%s2] sm:$0xf]
    %v65 = vld [vmem:[%s2 + $0x4] sm:$0xf]
    %v66 = vld [vmem:[%s2 + $0x8] sm:$0xf]
    %v67 = vld [vmem:[%s2 + $0xc] sm:$0xf]
    %v68 = vld [vmem:[#allocation6] sm:$0xf]
    %v69 = vld [vmem:[#allocation6 + $0x4] sm:$0xf]
    %v70 = vld [vmem:[#allocation6 + $0x8] sm:$0xf]
    %v71 = vld [vmem:[#allocation6 + $0xc] sm:$0xf]
    %v76 = vunpack.c.l.b16 %v64
    %v77 = vunpack.c.l.b16 %v65
    %v78 = vunpack.c.l.b16 %v66
    %v79 = vunpack.c.l.b16 %v67
    %v80 = vpack.c.b16 %v77, %v76
    %v81 = vpack.c.b16 %v79, %v78
    %v88 = vunpack.c.l.b16 %v68
    %v89 = vunpack.c.l.b16 %v69
    %v90 = vunpack.c.l.b16 %v70
    %v91 = vunpack.c.l.b16 %v71
    %v92 = vpack.c.b16 %v89, %v88
    %v93 = vpack.c.b16 %v91, %v90
    %v96 = vld [vmem:[%s6] sm:$0x1]
    %v98 = vlaneseq
    %v99 = vshrl.u32 %v98, 7
    %v100 = vsub.s32 0, %v99
    %v101 = vrot.slane %v96, %v100
    %v103 = vld [vmem:[%s0] sm:$0xff]
    %v104 = vld [vmem:[%s0 + $0x8] sm:$0xff]
    %v105 = vpack.c.bf16 %v104, %v103
    %v106 = vld [vmem:[#allocation3] sm:$0x7]
    %v107 = vld [vmem:[%s3] sm:$0x1]
    %v109 = vlaneseq
    %v110 = vshrl.u32 %v109, 7
    %v111 = vsub.s32 0, %v110
    %v112 = vrot.slane %v107, %v111
    %vm114 = vcmask 48128
    %v116 = vsel %vm114, %v105, 0
    %vm118 = vcmask 1042432
    %v120 = vsel %vm118, %v106, 0
    %122 = vmatprep.subr.bf16.mxu0 0
    %123 = vmatpush1.bf16.msra.mxu0 %v120
    %124 = vmatprep.subr.bf16.mxu0 0
    %125 = vmatpush1.bf16.msra.mxu0 0
    %126 = vmatprep.subr.bf16.mxu0 0
    %127 = vmatpush1.bf16.msra.mxu0 0
    %128 = vmatprep.subr.bf16.mxu0 0
    %129 = vmatpush1.bf16.msra.mxu0 0
    %130 = vmatprep.subr.bf16.mxu0 0
    %131 = vmatpush1.bf16.msra.mxu0 0
    %132 = vmatprep.subr.bf16.mxu0 0
    %133 = vmatpush1.bf16.msra.mxu0 0
    %134 = vmatprep.subr.bf16.mxu0 0
    %135 = vmatpush1.bf16.msra.mxu0 0
    %136 = vmatprep.subr.bf16.mxu0 0
    %137 = vmatpush1.bf16.msra.mxu0 0
    %138 = vmatprep.subr.bf16.mxu0 0
    %139 = vmatpush1.bf16.msra.mxu0 0
    %140 = vmatprep.subr.bf16.mxu0 0
    %141 = vmatpush1.bf16.msra.mxu0 0
    %142 = vmatprep.subr.bf16.mxu0 0
    %143 = vmatpush1.bf16.msra.mxu0 0
    %144 = vmatprep.subr.bf16.mxu0 0
    %145 = vmatpush1.bf16.msra.mxu0 0
    %146 = vmatprep.subr.bf16.mxu0 0
    %147 = vmatpush1.bf16.msra.mxu0 0
    %148 = vmatprep.subr.bf16.mxu0 0
    %149 = vmatpush1.bf16.msra.mxu0 0
    %150 = vmatprep.subr.bf16.mxu0 0
    %151 = vmatpush1.bf16.msra.mxu0 0
    %152 = vmatprep.subr.bf16.mxu0 0
    %153 = vmatpush1.bf16.msra.mxu0 0
    %154 = vmatprep.mubr.bf16.mxu0 0
    %155 = vmatmul.mubr.bf16.gmra.mrb[0].mxu0 %v116
    %v156 = vpop.f32.mrb[0].mxu0
    %v157 = vadd.f32 %v112, %v156
    %v158 = vpop.f32.mrb[0].mxu0
    %v159 = vpop.f32.mrb[0].mxu0
    %v160 = vadd.f32 %v112, %v159
    %v161 = vpop.f32.mrb[0].mxu0
    %162 = vdwg.mxu0
    %163 = vst [vmem:[#allocation2] sm:$0xff] %v157
    %164 = vst [vmem:[#allocation2 + $0x8] sm:$0xff] %v160
    %v165 = vld [vmem:[#allocation2] sm:$0x3]
    %v166 = vtanh.pop %v165
    %v167 = vmul.f32 %v166, 0.5
    %v168 = vadd.f32 %v167, 0.5
    %v169 = vmul.f32 %v168, 0.0
    %171 = vrot.lane.b32.xlu0 %v166, 64
    %v172 = vpop.permute.xlu0 %171
    %v174 = vmul.f32 %v168, %v172
    %176 = vrot.lane.b32.xlu0 %v174, 32
    %v177 = vpop.permute.xlu0 %176
    %v179 = vadd.f32 %v169, %v177
    %v180 = vtanh.pop %v179
    %182 = vrot.lane.b32.xlu0 %v180, 64
    %v183 = vpop.permute.xlu0 %182
    %v185 = vmul.f32 %v168, %v183
    %v186 = vpack.c.bf16 %v185, %v185
    %188 = vrot.lane.b32.xlu0 %v186, 32
    %v189 = vpop.permute.xlu0 %188
    %v194 = vunpack.c.l.b16 %v60
    %v195 = vunpack.c.l.b16 %v61
    %v196 = vunpack.c.l.b16 %v62
    %v197 = vunpack.c.l.b16 %v63
    %v198 = vpack.c.b16 %v195, %v194
    %v199 = vpack.c.b16 %v197, %v196
    %vm202 = vcmask 261120
    %v204 = vsel %vm202, %v189, 0
    %206 = vmatprep.subr.bf16.mxu0 0
    %207 = vmatpush1.bf16.msra.mxu0 %v198
    %208 = vmatprep.subr.bf16.mxu0 0
    %209 = vmatpush1.bf16.msra.mxu0 %v199
    %210 = vmatprep.subr.bf16.mxu0 0
    %211 = vmatpush1.bf16.msra.mxu0 0
    %212 = vmatprep.subr.bf16.mxu0 0
    %213 = vmatpush1.bf16.msra.mxu0 0
    %214 = vmatprep.subr.bf16.mxu0 0
    %215 = vmatpush1.bf16.msra.mxu0 0
    %216 = vmatprep.subr.bf16.mxu0 0
    %217 = vmatpush1.bf16.msra.mxu0 0
    %218 = vmatprep.subr.bf16.mxu0 0
    %219 = vmatpush1.bf16.msra.mxu0 0
    %220 = vmatprep.subr.bf16.mxu0 0
    %221 = vmatpush1.bf16.msra.mxu0 0
    %222 = vmatprep.subr.bf16.mxu0 0
    %223 = vmatpush1.bf16.msra.mxu0 0
    %224 = vmatprep.subr.bf16.mxu0 0
    %225 = vmatpush1.bf16.msra.mxu0 0
    %226 = vmatprep.subr.bf16.mxu0 0
    %227 = vmatpush1.bf16.msra.mxu0 0
    %228 = vmatprep.subr.bf16.mxu0 0
    %229 = vmatpush1.bf16.msra.mxu0 0
    %230 = vmatprep.subr.bf16.mxu0 0
    %231 = vmatpush1.bf16.msra.mxu0 0
    %232 = vmatprep.subr.bf16.mxu0 0
    %233 = vmatpush1.bf16.msra.mxu0 0
    %234 = vmatprep.subr.bf16.mxu0 0
    %235 = vmatpush1.bf16.msra.mxu0 0
    %236 = vmatprep.subr.bf16.mxu0 0
    %237 = vmatpush1.bf16.msra.mxu0 0
    %238 = vmatprep.mubr.bf16.mxu0 0
    %239 = vmatmul.mubr.bf16.gmra.mrb[0].mxu0 %v204
    %v240 = vpop.f32.mrb[0].mxu0
    %v241 = vadd.f32 %v101, %v240
    %v242 = vpop.f32.mrb[0].mxu0
    %v243 = vpop.f32.mrb[0].mxu0
    %v244 = vpop.f32.mrb[0].mxu0
    %245 = vdwg.mxu0
    %vm246 = vcmask 1041408
    %v247 = vsel %vm246, %v185, 0.0
    %v248 = vpack.c.bf16 %v247, %v247
    %250 = vrot.lane.b32.xlu0 %v248, 32
    %v251 = vpop.permute.xlu0 %250
    %v253 = vsel %vm202, %v251, 0
    %255 = vmatprep.subr.bf16.mxu0 %v92
    %256 = vmatpush1.bf16.msra.mxu0 %v80
    %257 = vmatprep.subr.bf16.mxu0 %v93
    %258 = vmatpush1.bf16.msra.mxu0 %v81
    %259 = vmatprep.subr.bf16.mxu0 0
    %260 = vmatpush1.bf16.msra.mxu0 0
    %261 = vmatprep.subr.bf16.mxu0 0
    %262 = vmatpush1.bf16.msra.mxu0 0
    %263 = vmatprep.subr.bf16.mxu0 0
    %264 = vmatpush1.bf16.msra.mxu0 0
    %265 = vmatprep.subr.bf16.mxu0 0
    %266 = vmatpush1.bf16.msra.mxu0 0
    %267 = vmatprep.subr.bf16.mxu0 0
    %268 = vmatpush1.bf16.msra.mxu0 0
    %269 = vmatprep.subr.bf16.mxu0 0
    %270 = vmatpush1.bf16.msra.mxu0 0
    %271 = vmatprep.subr.bf16.mxu0 0
    %272 = vmatpush1.bf16.msra.mxu0 0
    %273 = vmatprep.subr.bf16.mxu0 0
    %274 = vmatpush1.bf16.msra.mxu0 0
    %275 = vmatprep.subr.bf16.mxu0 0
    %276 = vmatpush1.bf16.msra.mxu0 0
    %277 = vmatprep.subr.bf16.mxu0 0
    %278 = vmatpush1.bf16.msra.mxu0 0
    %279 = vmatprep.subr.bf16.mxu0 0
    %280 = vmatpush1.bf16.msra.mxu0 0
    %281 = vmatprep.subr.bf16.mxu0 0
    %282 = vmatpush1.bf16.msra.mxu0 0
    %283 = vmatprep.subr.bf16.mxu0 0
    %284 = vmatpush1.bf16.msra.mxu0 0
    %285 = vmatprep.subr.bf16.mxu0 0
    %286 = vmatpush1.bf16.msra.mxu0 0
    %287 = vmatprep.mubr.bf16.mxu0 0
    %288 = vmatmul.mubr.bf16.gmra.mrb[0].mxu0 %v253
    %v289 = vpop.f32.mrb[0].mxu0
    %v290 = vadd.f32 0.0, %v289
    %v291 = vpop.f32.mrb[0].mxu0
    %v292 = vadd.f32 0.0, %v291
    %v293 = vpop.f32.mrb[0].mxu0
    %v294 = vpop.f32.mrb[0].mxu0
    %295 = vdwg.mxu0
    %s296 = scalar_lea.vmem [#allocation2], 2
    %v297 = vld [vmem:[%s296] sm:$0x3]
    %v298 = vadd.f32 %v297, %v290
    %v299 = vtanh.pop %v298
    %v300 = vmul.f32 %v299, 0.5
    %v301 = vadd.f32 %v300, 0.5
    %v302 = vmul.f32 %v301, %v179
    %304 = vrot.lane.b32.xlu0 %v299, 64
    %v305 = vpop.permute.xlu0 %304
    %v307 = vmul.f32 %v301, %v305
    %309 = vrot.lane.b32.xlu0 %v307, 32
    %v310 = vpop.permute.xlu0 %309
    %v312 = vadd.f32 %v302, %v310
    %v313 = vtanh.pop %v312
    %315 = vrot.lane.b32.xlu0 %v313, 64
    %v316 = vpop.permute.xlu0 %315
    %v318 = vmul.f32 %v301, %v316
    %v320 = vrot.slane %v292, 2
    %v322 = vadd.f32 %v241, %v320
    %v323 = vtanh.pop %v322
    %v324 = vmul.f32 %v323, 0.5
    %v325 = vadd.f32 %v324, 0.5
    %v326 = vmul.f32 %v325, 0.0
    %328 = vrot.lane.b32.xlu0 %v323, 64
    %v329 = vpop.permute.xlu0 %328
    %v331 = vmul.f32 %v325, %v329
    %333 = vrot.lane.b32.xlu0 %v331, 32
    %v334 = vpop.permute.xlu0 %333
    %v336 = vadd.f32 %v326, %v334
    %v337 = vtanh.pop %v336
    %339 = vrot.lane.b32.xlu0 %v337, 64
    %v340 = vpop.permute.xlu0 %339
    %v342 = vmul.f32 %v325, %v340
    %v343 = vpack.c.bf16 %v318, %v318
    %345 = vrot.lane.b32.xlu0 %v343, 32
    %v346 = vpop.permute.xlu0 %345
    %v348 = vsel %vm202, %v346, 0
    %350 = vmatprep.subr.bf16.mxu0 0
    %351 = vmatpush1.bf16.msra.mxu0 %v198
    %352 = vmatprep.subr.bf16.mxu0 0
    %353 = vmatpush1.bf16.msra.mxu0 %v199
    %354 = vmatprep.subr.bf16.mxu0 0
    %355 = vmatpush1.bf16.msra.mxu0 0
    %356 = vmatprep.subr.bf16.mxu0 0
    %357 = vmatpush1.bf16.msra.mxu0 0
    %358 = vmatprep.subr.bf16.mxu0 0
    %359 = vmatpush1.bf16.msra.mxu0 0
    %360 = vmatprep.subr.bf16.mxu0 0
    %361 = vmatpush1.bf16.msra.mxu0 0
    %362 = vmatprep.subr.bf16.mxu0 0
    %363 = vmatpush1.bf16.msra.mxu0 0
    %364 = vmatprep.subr.bf16.mxu0 0
    %365 = vmatpush1.bf16.msra.mxu0 0
    %366 = vmatprep.subr.bf16.mxu0 0
    %367 = vmatpush1.bf16.msra.mxu0 0
    %368 = vmatprep.subr.bf16.mxu0 0
    %369 = vmatpush1.bf16.msra.mxu0 0
    %370 = vmatprep.subr.bf16.mxu0 0
    %371 = vmatpush1.bf16.msra.mxu0 0
    %372 = vmatprep.subr.bf16.mxu0 0
    %373 = vmatpush1.bf16.msra.mxu0 0
    %374 = vmatprep.subr.bf16.mxu0 0
    %375 = vmatpush1.bf16.msra.mxu0 0
    %376 = vmatprep.subr.bf16.mxu0 0
    %377 = vmatpush1.bf16.msra.mxu0 0
    %378 = vmatprep.subr.bf16.mxu0 0
    %379 = vmatpush1.bf16.msra.mxu0 0
    %380 = vmatprep.subr.bf16.mxu0 0
    %381 = vmatpush1.bf16.msra.mxu0 0
    %382 = vmatprep.mubr.bf16.mxu0 0
    %383 = vmatmul.mubr.bf16.gmra.mrb[0].mxu0 %v348
    %v384 = vpop.f32.mrb[0].mxu0
    %v385 = vadd.f32 %v101, %v384
    %v386 = vpop.f32.mrb[0].mxu0
    %v387 = vpop.f32.mrb[0].mxu0
    %v388 = vpop.f32.mrb[0].mxu0
    %389 = vdwg.mxu0
    %v391 = vrot.slane %v342, 6
    %v393 = vsel %vm246, %v318, %v391
    %v394 = vpack.c.bf16 %v393, %v393
    %396 = vrot.lane.b32.xlu0 %v394, 32
    %v397 = vpop.permute.xlu0 %396
    %v399 = vsel %vm202, %v397, 0
    %401 = vmatprep.subr.bf16.mxu0 %v92
    %402 = vmatpush1.bf16.msra.mxu0 %v80
    %403 = vmatprep.subr.bf16.mxu0 %v93
    %404 = vmatpush1.bf16.msra.mxu0 %v81
    %405 = vmatprep.subr.bf16.mxu0 0
    %406 = vmatpush1.bf16.msra.mxu0 0
    %407 = vmatprep.subr.bf16.mxu0 0
    %408 = vmatpush1.bf16.msra.mxu0 0
    %409 = vmatprep.subr.bf16.mxu0 0
    %410 = vmatpush1.bf16.msra.mxu0 0
    %411 = vmatprep.subr.bf16.mxu0 0
    %412 = vmatpush1.bf16.msra.mxu0 0
    %413 = vmatprep.subr.bf16.mxu0 0
    %414 = vmatpush1.bf16.msra.mxu0 0
    %415 = vmatprep.subr.bf16.mxu0 0
    %416 = vmatpush1.bf16.msra.mxu0 0
    %417 = vmatprep.subr.bf16.mxu0 0
    %418 = vmatpush1.bf16.msra.mxu0 0
    %419 = vmatprep.subr.bf16.mxu0 0
    %420 = vmatpush1.bf16.msra.mxu0 0
    %421 = vmatprep.subr.bf16.mxu0 0
    %422 = vmatpush1.bf16.msra.mxu0 0
    %423 = vmatprep.subr.bf16.mxu0 0
    %424 = vmatpush1.bf16.msra.mxu0 0
    %425 = vmatprep.subr.bf16.mxu0 0
    %426 = vmatpush1.bf16.msra.mxu0 0
    %427 = vmatprep.subr.bf16.mxu0 0
    %428 = vmatpush1.bf16.msra.mxu0 0
    %429 = vmatprep.subr.bf16.mxu0 0
    %430 = vmatpush1.bf16.msra.mxu0 0
    %431 = vmatprep.subr.bf16.mxu0 0
    %432 = vmatpush1.bf16.msra.mxu0 0
    %433 = vmatprep.mubr.bf16.mxu0 0
    %434 = vmatmul.mubr.bf16.gmra.mrb[0].mxu0 %v399
    %v435 = vpop.f32.mrb[0].mxu0
    %v436 = vadd.f32 0.0, %v435
    %v437 = vpop.f32.mrb[0].mxu0
    %v438 = vadd.f32 0.0, %v437
    %v439 = vpop.f32.mrb[0].mxu0
    %v440 = vpop.f32.mrb[0].mxu0
    %441 = vdwg.mxu0
    %s442 = scalar_lea.vmem [#allocation2], 4
    %v443 = vld [vmem:[%s442] sm:$0x3]
    %v444 = vadd.f32 %v443, %v436
    %v445 = vtanh.pop %v444
    %v446 = vmul.f32 %v445, 0.5
    %v447 = vadd.f32 %v446, 0.5
    %v448 = vmul.f32 %v447, %v312
    %450 = vrot.lane.b32.xlu0 %v445, 64
    %v451 = vpop.permute.xlu0 %450
    %v453 = vmul.f32 %v447, %v451
    %455 = vrot.lane.b32.xlu0 %v453, 32
    %v456 = vpop.permute.xlu0 %455
    %v458 = vadd.f32 %v448, %v456
    %v459 = vtanh.pop %v458
    %461 = vrot.lane.b32.xlu0 %v459, 64
    %v462 = vpop.permute.xlu0 %461
    %v464 = vmul.f32 %v447, %v462
    %v466 = vrot.slane %v438, 2
    %v468 = vadd.f32 %v385, %v466
    %v469 = vtanh.pop %v468
    %v470 = vmul.f32 %v469, 0.5
    %v471 = vadd.f32 %v470, 0.5
    %v472 = vmul.f32 %v471, %v336
    %474 = vrot.lane.b32.xlu0 %v469, 64
    %v475 = vpop.permute.xlu0 %474
    %v477 = vmul.f32 %v471, %v475
    %479 = vrot.lane.b32.xlu0 %v477, 32
    %v480 = vpop.permute.xlu0 %479
    %v482 = vadd.f32 %v472, %v480
    %v483 = vtanh.pop %v482
    %485 = vrot.lane.b32.xlu0 %v483, 64
    %v486 = vpop.permute.xlu0 %485
    %v488 = vmul.f32 %v471, %v486
    %v489 = vpack.c.bf16 %v464, %v464
    %491 = vrot.lane.b32.xlu0 %v489, 32
    %v492 = vpop.permute.xlu0 %491
    %v494 = vsel %vm202, %v492, 0
    %496 = vmatprep.subr.bf16.mxu0 0
    %497 = vmatpush1.bf16.msra.mxu0 %v198
    %498 = vmatprep.subr.bf16.mxu0 0
    %499 = vmatpush1.bf16.msra.mxu0 %v199
    %500 = vmatprep.subr.bf16.mxu0 0
    %501 = vmatpush1.bf16.msra.mxu0 0
    %502 = vmatprep.subr.bf16.mxu0 0
    %503 = vmatpush1.bf16.msra.mxu0 0
    %504 = vmatprep.subr.bf16.mxu0 0
    %505 = vmatpush1.bf16.msra.mxu0 0
    %506 = vmatprep.subr.bf16.mxu0 0
    %507 = vmatpush1.bf16.msra.mxu0 0
    %508 = vmatprep.subr.bf16.mxu0 0
    %509 = vmatpush1.bf16.msra.mxu0 0
    %510 = vmatprep.subr.bf16.mxu0 0
    %511 = vmatpush1.bf16.msra.mxu0 0
    %512 = vmatprep.subr.bf16.mxu0 0
    %513 = vmatpush1.bf16.msra.mxu0 0
    %514 = vmatprep.subr.bf16.mxu0 0
    %515 = vmatpush1.bf16.msra.mxu0 0
    %516 = vmatprep.subr.bf16.mxu0 0
    %517 = vmatpush1.bf16.msra.mxu0 0
    %518 = vmatprep.subr.bf16.mxu0 0
    %519 = vmatpush1.bf16.msra.mxu0 0
    %520 = vmatprep.subr.bf16.mxu0 0
    %521 = vmatpush1.bf16.msra.mxu0 0
    %522 = vmatprep.subr.bf16.mxu0 0
    %523 = vmatpush1.bf16.msra.mxu0 0
    %524 = vmatprep.subr.bf16.mxu0 0
    %525 = vmatpush1.bf16.msra.mxu0 0
    %526 = vmatprep.subr.bf16.mxu0 0
    %527 = vmatpush1.bf16.msra.mxu0 0
    %528 = vmatprep.mubr.bf16.mxu0 0
    %529 = vmatmul.mubr.bf16.gmra.mrb[0].mxu0 %v494
    %v530 = vpop.f32.mrb[0].mxu0
    %v531 = vadd.f32 %v101, %v530
    %v532 = vpop.f32.mrb[0].mxu0
    %v533 = vpop.f32.mrb[0].mxu0
    %v534 = vpop.f32.mrb[0].mxu0
    %535 = vdwg.mxu0
    %v537 = vrot.slane %v488, 6
    %v539 = vsel %vm246, %v464, %v537
    %v540 = vpack.c.bf16 %v539, %v539
    %542 = vrot.lane.b32.xlu0 %v540, 32
    %v543 = vpop.permute.xlu0 %542
    %v545 = vsel %vm202, %v543, 0
    %547 = vmatprep.subr.bf16.mxu0 %v92
    %548 = vmatpush1.bf16.msra.mxu0 %v80
    %549 = vmatprep.subr.bf16.mxu0 %v93
    %550 = vmatpush1.bf16.msra.mxu0 %v81
    %551 = vmatprep.subr.bf16.mxu0 0
    %552 = vmatpush1.bf16.msra.mxu0 0
    %553 = vmatprep.subr.bf16.mxu0 0
    %554 = vmatpush1.bf16.msra.mxu0 0
    %555 = vmatprep.subr.bf16.mxu0 0
    %556 = vmatpush1.bf16.msra.mxu0 0
    %557 = vmatprep.subr.bf16.mxu0 0
    %558 = vmatpush1.bf16.msra.mxu0 0
    %559 = vmatprep.subr.bf16.mxu0 0
    %560 = vmatpush1.bf16.msra.mxu0 0
    %561 = vmatprep.subr.bf16.mxu0 0
    %562 = vmatpush1.bf16.msra.mxu0 0
    %563 = vmatprep.subr.bf16.mxu0 0
    %564 = vmatpush1.bf16.msra.mxu0 0
    %565 = vmatprep.subr.bf16.mxu0 0
    %566 = vmatpush1.bf16.msra.mxu0 0
    %567 = vmatprep.subr.bf16.mxu0 0
    %568 = vmatpush1.bf16.msra.mxu0 0
    %569 = vmatprep.subr.bf16.mxu0 0
    %570 = vmatpush1.bf16.msra.mxu0 0
    %571 = vmatprep.subr.bf16.mxu0 0
    %572 = vmatpush1.bf16.msra.mxu0 0
    %573 = vmatprep.subr.bf16.mxu0 0
    %574 = vmatpush1.bf16.msra.mxu0 0
    %575 = vmatprep.subr.bf16.mxu0 0
    %576 = vmatpush1.bf16.msra.mxu0 0
    %577 = vmatprep.subr.bf16.mxu0 0
    %578 = vmatpush1.bf16.msra.mxu0 0
    %579 = vmatprep.mubr.bf16.mxu0 0
    %580 = vmatmul.mubr.bf16.gmra.mrb[0].mxu0 %v545
    %v581 = vpop.f32.mrb[0].mxu0
    %v582 = vadd.f32 0.0, %v581
    %v583 = vpop.f32.mrb[0].mxu0
    %v584 = vadd.f32 0.0, %v583
    %v585 = vpop.f32.mrb[0].mxu0
    %v586 = vpop.f32.mrb[0].mxu0
    %587 = vdwg.mxu0
    %s588 = scalar_lea.vmem [#allocation2], 6
    %v589 = vld [vmem:[%s588] sm:$0x3]
    %v590 = vadd.f32 %v589, %v582
    %v591 = vtanh.pop %v590
    %v592 = vmul.f32 %v591, 0.5
    %v593 = vadd.f32 %v592, 0.5
    %v594 = vmul.f32 %v593, %v458
    %596 = vrot.lane.b32.xlu0 %v591, 64
    %v597 = vpop.permute.xlu0 %596
    %v599 = vmul.f32 %v593, %v597
    %601 = vrot.lane.b32.xlu0 %v599, 32
    %v602 = vpop.permute.xlu0 %601
    %v604 = vadd.f32 %v594, %v602
    %v605 = vtanh.pop %v604
    %607 = vrot.lane.b32.xlu0 %v605, 64
    %v608 = vpop.permute.xlu0 %607
    %v610 = vmul.f32 %v593, %v608
    %v612 = vrot.slane %v584, 2
    %v614 = vadd.f32 %v531, %v612
    %v615 = vtanh.pop %v614
    %v616 = vmul.f32 %v615, 0.5
    %v617 = vadd.f32 %v616, 0.5
    %v618 = vmul.f32 %v617, %v482
    %620 = vrot.lane.b32.xlu0 %v615, 64
    %v621 = vpop.permute.xlu0 %620
    %v623 = vmul.f32 %v617, %v621
    %625 = vrot.lane.b32.xlu0 %v623, 32
    %v626 = vpop.permute.xlu0 %625
    %v628 = vadd.f32 %v618, %v626
    %v629 = vtanh.pop %v628
    %631 = vrot.lane.b32.xlu0 %v629, 64
    %v632 = vpop.permute.xlu0 %631
    %v634 = vmul.f32 %v617, %v632
    %v635 = vpack.c.bf16 %v610, %v610
    %637 = vrot.lane.b32.xlu0 %v635, 32
    %v638 = vpop.permute.xlu0 %637
    %v640 = vsel %vm202, %v638, 0
    %642 = vmatprep.subr.bf16.mxu0 0
    %643 = vmatpush1.bf16.msra.mxu0 %v198
    %644 = vmatprep.subr.bf16.mxu0 0
    %645 = vmatpush1.bf16.msra.mxu0 %v199
    %646 = vmatprep.subr.bf16.mxu0 0
    %647 = vmatpush1.bf16.msra.mxu0 0
    %648 = vmatprep.subr.bf16.mxu0 0
    %649 = vmatpush1.bf16.msra.mxu0 0
    %650 = vmatprep.subr.bf16.mxu0 0
    %651 = vmatpush1.bf16.msra.mxu0 0
    %652 = vmatprep.subr.bf16.mxu0 0
    %653 = vmatpush1.bf16.msra.mxu0 0
    %654 = vmatprep.subr.bf16.mxu0 0
    %655 = vmatpush1.bf16.msra.mxu0 0
    %656 = vmatprep.subr.bf16.mxu0 0
    %657 = vmatpush1.bf16.msra.mxu0 0
    %658 = vmatprep.subr.bf16.mxu0 0
    %659 = vmatpush1.bf16.msra.mxu0 0
    %660 = vmatprep.subr.bf16.mxu0 0
    %661 = vmatpush1.bf16.msra.mxu0 0
    %662 = vmatprep.subr.bf16.mxu0 0
    %663 = vmatpush1.bf16.msra.mxu0 0
    %664 = vmatprep.subr.bf16.mxu0 0
    %665 = vmatpush1.bf16.msra.mxu0 0
    %666 = vmatprep.subr.bf16.mxu0 0
    %667 = vmatpush1.bf16.msra.mxu0 0
    %668 = vmatprep.subr.bf16.mxu0 0
    %669 = vmatpush1.bf16.msra.mxu0 0
    %670 = vmatprep.subr.bf16.mxu0 0
    %671 = vmatpush1.bf16.msra.mxu0 0
    %672 = vmatprep.subr.bf16.mxu0 0
    %673 = vmatpush1.bf16.msra.mxu0 0
    %674 = vmatprep.mubr.bf16.mxu0 0
    %675 = vmatmul.mubr.bf16.gmra.mrb[0].mxu0 %v640
    %v676 = vpop.f32.mrb[0].mxu0
    %v677 = vadd.f32 %v101, %v676
    %v678 = vpop.f32.mrb[0].mxu0
    %v679 = vpop.f32.mrb[0].mxu0
    %v680 = vpop.f32.mrb[0].mxu0
    %681 = vdwg.mxu0
    %v683 = vrot.slane %v634, 6
    %v685 = vsel %vm246, %v610, %v683
    %v686 = vpack.c.bf16 %v685, %v685
    %688 = vrot.lane.b32.xlu0 %v686, 32
    %v689 = vpop.permute.xlu0 %688
    %v691 = vsel %vm202, %v689, 0
    %693 = vmatprep.subr.bf16.mxu0 %v92
    %694 = vmatpush1.bf16.msra.mxu0 %v80
    %695 = vmatprep.subr.bf16.mxu0 %v93
    %696 = vmatpush1.bf16.msra.mxu0 %v81
    %697 = vmatprep.subr.bf16.mxu0 0
    %698 = vmatpush1.bf16.msra.mxu0 0
    %699 = vmatprep.subr.bf16.mxu0 0
    %700 = vmatpush1.bf16.msra.mxu0 0
    %701 = vmatprep.subr.bf16.mxu0 0
    %702 = vmatpush1.bf16.msra.mxu0 0
    %703 = vmatprep.subr.bf16.mxu0 0
    %704 = vmatpush1.bf16.msra.mxu0 0
    %705 = vmatprep.subr.bf16.mxu0 0
    %706 = vmatpush1.bf16.msra.mxu0 0
    %707 = vmatprep.subr.bf16.mxu0 0
    %708 = vmatpush1.bf16.msra.mxu0 0
    %709 = vmatprep.subr.bf16.mxu0 0
    %710 = vmatpush1.bf16.msra.mxu0 0
    %711 = vmatprep.subr.bf16.mxu0 0
    %712 = vmatpush1.bf16.msra.mxu0 0
    %713 = vmatprep.subr.bf16.mxu0 0
    %714 = vmatpush1.bf16.msra.mxu0 0
    %715 = vmatprep.subr.bf16.mxu0 0
    %716 = vmatpush1.bf16.msra.mxu0 0
    %717 = vmatprep.subr.bf16.mxu0 0
    %718 = vmatpush1.bf16.msra.mxu0 0
    %719 = vmatprep.subr.bf16.mxu0 0
    %720 = vmatpush1.bf16.msra.mxu0 0
    %721 = vmatprep.subr.bf16.mxu0 0
    %722 = vmatpush1.bf16.msra.mxu0 0
    %723 = vmatprep.subr.bf16.mxu0 0
    %724 = vmatpush1.bf16.msra.mxu0 0
    %725 = vmatprep.mubr.bf16.mxu0 0
    %726 = vmatmul.mubr.bf16.gmra.mrb[0].mxu0 %v691
    %v727 = vpop.f32.mrb[0].mxu0
    %v728 = vadd.f32 0.0, %v727
    %v729 = vpop.f32.mrb[0].mxu0
    %v730 = vadd.f32 0.0, %v729
    %v731 = vpop.f32.mrb[0].mxu0
    %v732 = vpop.f32.mrb[0].mxu0
    %733 = vdwg.mxu0
    %s734 = scalar_lea.vmem [#allocation2], 8
    %v735 = vld [vmem:[%s734] sm:$0x3]
    %v736 = vadd.f32 %v735, %v728
    %v737 = vtanh.pop %v736
    %v738 = vmul.f32 %v737, 0.5
    %v739 = vadd.f32 %v738, 0.5
    %v740 = vmul.f32 %v739, %v604
    %742 = vrot.lane.b32.xlu0 %v737, 64
    %v743 = vpop.permute.xlu0 %742
    %v745 = vmul.f32 %v739, %v743
    %747 = vrot.lane.b32.xlu0 %v745, 32
    %v748 = vpop.permute.xlu0 %747
    %v750 = vadd.f32 %v740, %v748
    %v751 = vtanh.pop %v750
    %753 = vrot.lane.b32.xlu0 %v751, 64
    %v754 = vpop.permute.xlu0 %753
    %v756 = vmul.f32 %v739, %v754
    %v758 = vrot.slane %v730, 2
    %v760 = vadd.f32 %v677, %v758
    %v761 = vtanh.pop %v760
    %v762 = vmul.f32 %v761, 0.5
    %v763 = vadd.f32 %v762, 0.5
    %v764 = vmul.f32 %v763, %v628
    %766 = vrot.lane.b32.xlu0 %v761, 64
    %v767 = vpop.permute.xlu0 %766
    %v769 = vmul.f32 %v763, %v767
    %771 = vrot.lane.b32.xlu0 %v769, 32
    %v772 = vpop.permute.xlu0 %771
    %v774 = vadd.f32 %v764, %v772
    %v775 = vtanh.pop %v774
    %777 = vrot.lane.b32.xlu0 %v775, 64
    %v778 = vpop.permute.xlu0 %777
    %v780 = vmul.f32 %v763, %v778
    %v781 = vpack.c.bf16 %v756, %v756
    %783 = vrot.lane.b32.xlu0 %v781, 32
    %v784 = vpop.permute.xlu0 %783
    %v786 = vsel %vm202, %v784, 0
    %788 = vmatprep.subr.bf16.mxu0 0
    %789 = vmatpush1.bf16.msra.mxu0 %v198
    %790 = vmatprep.subr.bf16.mxu0 0
    %791 = vmatpush1.bf16.msra.mxu0 %v199
    %792 = vmatprep.subr.bf16.mxu0 0
    %793 = vmatpush1.bf16.msra.mxu0 0
    %794 = vmatprep.subr.bf16.mxu0 0
    %795 = vmatpush1.bf16.msra.mxu0 0
    %796 = vmatprep.subr.bf16.mxu0 0
    %797 = vmatpush1.bf16.msra.mxu0 0
    %798 = vmatprep.subr.bf16.mxu0 0
    %799 = vmatpush1.bf16.msra.mxu0 0
    %800 = vmatprep.subr.bf16.mxu0 0
    %801 = vmatpush1.bf16.msra.mxu0 0
    %802 = vmatprep.subr.bf16.mxu0 0
    %803 = vmatpush1.bf16.msra.mxu0 0
    %804 = vmatprep.subr.bf16.mxu0 0
    %805 = vmatpush1.bf16.msra.mxu0 0
    %806 = vmatprep.subr.bf16.mxu0 0
    %807 = vmatpush1.bf16.msra.mxu0 0
    %808 = vmatprep.subr.bf16.mxu0 0
    %809 = vmatpush1.bf16.msra.mxu0 0
    %810 = vmatprep.subr.bf16.mxu0 0
    %811 = vmatpush1.bf16.msra.mxu0 0
    %812 = vmatprep.subr.bf16.mxu0 0
    %813 = vmatpush1.bf16.msra.mxu0 0
    %814 = vmatprep.subr.bf16.mxu0 0
    %815 = vmatpush1.bf16.msra.mxu0 0
    %816 = vmatprep.subr.bf16.mxu0 0
    %817 = vmatpush1.bf16.msra.mxu0 0
    %818 = vmatprep.subr.bf16.mxu0 0
    %819 = vmatpush1.bf16.msra.mxu0 0
    %820 = vmatprep.mubr.bf16.mxu0 0
    %821 = vmatmul.mubr.bf16.gmra.mrb[0].mxu0 %v786
    %v822 = vpop.f32.mrb[0].mxu0
    %v823 = vadd.f32 %v101, %v822
    %v824 = vpop.f32.mrb[0].mxu0
    %v825 = vpop.f32.mrb[0].mxu0
    %v826 = vpop.f32.mrb[0].mxu0
    %827 = vdwg.mxu0
    %v829 = vrot.slane %v780, 6
    %v831 = vsel %vm246, %v756, %v829
    %v832 = vpack.c.bf16 %v831, %v831
    %834 = vrot.lane.b32.xlu0 %v832, 32
    %v835 = vpop.permute.xlu0 %834
    %v837 = vsel %vm202, %v835, 0
    %839 = vmatprep.subr.bf16.mxu0 %v92
    %840 = vmatpush1.bf16.msra.mxu0 %v80
    %841 = vmatprep.subr.bf16.mxu0 %v93
    %842 = vmatpush1.bf16.msra.mxu0 %v81
    %843 = vmatprep.subr.bf16.mxu0 0
    %844 = vmatpush1.bf16.msra.mxu0 0
    %845 = vmatprep.subr.bf16.mxu0 0
    %846 = vmatpush1.bf16.msra.mxu0 0
    %847 = vmatprep.subr.bf16.mxu0 0
    %848 = vmatpush1.bf16.msra.mxu0 0
    %849 = vmatprep.subr.bf16.mxu0 0
    %850 = vmatpush1.bf16.msra.mxu0 0
    %851 = vmatprep.subr.bf16.mxu0 0
    %852 = vmatpush1.bf16.msra.mxu0 0
    %853 = vmatprep.subr.bf16.mxu0 0
    %854 = vmatpush1.bf16.msra.mxu0 0
    %855 = vmatprep.subr.bf16.mxu0 0
    %856 = vmatpush1.bf16.msra.mxu0 0
    %857 = vmatprep.subr.bf16.mxu0 0
    %858 = vmatpush1.bf16.msra.mxu0 0
    %859 = vmatprep.subr.bf16.mxu0 0
    %860 = vmatpush1.bf16.msra.mxu0 0
    %861 = vmatprep.subr.bf16.mxu0 0
    %862 = vmatpush1.bf16.msra.mxu0 0
    %863 = vmatprep.subr.bf16.mxu0 0
    %864 = vmatpush1.bf16.msra.mxu0 0
    %865 = vmatprep.subr.bf16.mxu0 0
    %866 = vmatpush1.bf16.msra.mxu0 0
    %867 = vmatprep.subr.bf16.mxu0 0
    %868 = vmatpush1.bf16.msra.mxu0 0
    %869 = vmatprep.subr.bf16.mxu0 0
    %870 = vmatpush1.bf16.msra.mxu0 0
    %871 = vmatprep.mubr.bf16.mxu0 0
    %872 = vmatmul.mubr.bf16.gmra.mrb[0].mxu0 %v837
    %v873 = vpop.f32.mrb[0].mxu0
    %v874 = vadd.f32 0.0, %v873
    %v875 = vpop.f32.mrb[0].mxu0
    %v876 = vadd.f32 0.0, %v875
    %v877 = vpop.f32.mrb[0].mxu0
    %v878 = vpop.f32.mrb[0].mxu0
    %879 = vdwg.mxu0
    %s880 = scalar_lea.vmem [#allocation2], 10
    %v881 = vld [vmem:[%s880] sm:$0x3]
    %v882 = vadd.f32 %v881, %v874
    %v883 = vtanh.pop %v882
    %v884 = vmul.f32 %v883, 0.5
    %v885 = vadd.f32 %v884, 0.5
    %v886 = vmul.f32 %v885, %v750
    %888 = vrot.lane.b32.xlu0 %v883, 64
    %v889 = vpop.permute.xlu0 %888
    %v891 = vmul.f32 %v885, %v889
    %893 = vrot.lane.b32.xlu0 %v891, 32
    %v894 = vpop.permute.xlu0 %893
    %v896 = vadd.f32 %v886, %v894
    %v897 = vtanh.pop %v896
    %899 = vrot.lane.b32.xlu0 %v897, 64
    %v900 = vpop.permute.xlu0 %899
    %v902 = vmul.f32 %v885, %v900
    %v904 = vrot.slane %v876, 2
    %v906 = vadd.f32 %v823, %v904
    %v907 = vtanh.pop %v906
    %v908 = vmul.f32 %v907, 0.5
    %v909 = vadd.f32 %v908, 0.5
    %v910 = vmul.f32 %v909, %v774
    %912 = vrot.lane.b32.xlu0 %v907, 64
    %v913 = vpop.permute.xlu0 %912
    %v915 = vmul.f32 %v909, %v913
    %917 = vrot.lane.b32.xlu0 %v915, 32
    %v918 = vpop.permute.xlu0 %917
    %v920 = vadd.f32 %v910, %v918
    %v921 = vtanh.pop %v920
    %923 = vrot.lane.b32.xlu0 %v921, 64
    %v924 = vpop.permute.xlu0 %923
    %v926 = vmul.f32 %v909, %v924
    %v927 = vpack.c.bf16 %v902, %v902
    %929 = vrot.lane.b32.xlu0 %v927, 32
    %v930 = vpop.permute.xlu0 %929
    %v932 = vsel %vm202, %v930, 0
    %934 = vmatprep.subr.bf16.mxu0 0
    %935 = vmatpush1.bf16.msra.mxu0 %v198
    %936 = vmatprep.subr.bf16.mxu0 0
    %937 = vmatpush1.bf16.msra.mxu0 %v199
    %938 = vmatprep.subr.bf16.mxu0 0
    %939 = vmatpush1.bf16.msra.mxu0 0
    %940 = vmatprep.subr.bf16.mxu0 0
    %941 = vmatpush1.bf16.msra.mxu0 0
    %942 = vmatprep.subr.bf16.mxu0 0
    %943 = vmatpush1.bf16.msra.mxu0 0
    %944 = vmatprep.subr.bf16.mxu0 0
    %945 = vmatpush1.bf16.msra.mxu0 0
    %946 = vmatprep.subr.bf16.mxu0 0
    %947 = vmatpush1.bf16.msra.mxu0 0
    %948 = vmatprep.subr.bf16.mxu0 0
    %949 = vmatpush1.bf16.msra.mxu0 0
    %950 = vmatprep.subr.bf16.mxu0 0
    %951 = vmatpush1.bf16.msra.mxu0 0
    %952 = vmatprep.subr.bf16.mxu0 0
    %953 = vmatpush1.bf16.msra.mxu0 0
    %954 = vmatprep.subr.bf16.mxu0 0
    %955 = vmatpush1.bf16.msra.mxu0 0
    %956 = vmatprep.subr.bf16.mxu0 0
    %957 = vmatpush1.bf16.msra.mxu0 0
    %958 = vmatprep.subr.bf16.mxu0 0
    %959 = vmatpush1.bf16.msra.mxu0 0
    %960 = vmatprep.subr.bf16.mxu0 0
    %961 = vmatpush1.bf16.msra.mxu0 0
    %962 = vmatprep.subr.bf16.mxu0 0
    %963 = vmatpush1.bf16.msra.mxu0 0
    %964 = vmatprep.subr.bf16.mxu0 0
    %965 = vmatpush1.bf16.msra.mxu0 0
    %966 = vmatprep.mubr.bf16.mxu0 0
    %967 = vmatmul.mubr.bf16.gmra.mrb[0].mxu0 %v932
    %v968 = vpop.f32.mrb[0].mxu0
    %v969 = vadd.f32 %v101, %v968
    %v970 = vpop.f32.mrb[0].mxu0
    %v971 = vpop.f32.mrb[0].mxu0
    %v972 = vpop.f32.mrb[0].mxu0
    %973 = vdwg.mxu0
    %v975 = vrot.slane %v926, 6
    %v977 = vsel %vm246, %v902, %v975
    %v978 = vpack.c.bf16 %v977, %v977
    %980 = vrot.lane.b32.xlu0 %v978, 32
    %v981 = vpop.permute.xlu0 %980
    %v983 = vsel %vm202, %v981, 0
    %985 = vmatprep.subr.bf16.mxu0 %v92
    %986 = vmatpush1.bf16.msra.mxu0 %v80
    %987 = vmatprep.subr.bf16.mxu0 %v93
    %988 = vmatpush1.bf16.msra.mxu0 %v81
    %989 = vmatprep.subr.bf16.mxu0 0
    %990 = vmatpush1.bf16.msra.mxu0 0
    %991 = vmatprep.subr.bf16.mxu0 0
    %992 = vmatpush1.bf16.msra.mxu0 0
    %993 = vmatprep.subr.bf16.mxu0 0
    %994 = vmatpush1.bf16.msra.mxu0 0
    %995 = vmatprep.subr.bf16.mxu0 0
    %996 = vmatpush1.bf16.msra.mxu0 0
    %997 = vmatprep.subr.bf16.mxu0 0
    %998 = vmatpush1.bf16.msra.mxu0 0
    %999 = vmatprep.subr.bf16.mxu0 0
    %1000 = vmatpush1.bf16.msra.mxu0 0
    %1001 = vmatprep.subr.bf16.mxu0 0
    %1002 = vmatpush1.bf16.msra.mxu0 0
    %1003 = vmatprep.subr.bf16.mxu0 0
    %1004 = vmatpush1.bf16.msra.mxu0 0
    %1005 = vmatprep.subr.bf16.mxu0 0
    %1006 = vmatpush1.bf16.msra.mxu0 0
    %1007 = vmatprep.subr.bf16.mxu0 0
    %1008 = vmatpush1.bf16.msra.mxu0 0
    %1009 = vmatprep.subr.bf16.mxu0 0
    %1010 = vmatpush1.bf16.msra.mxu0 0
    %1011 = vmatprep.subr.bf16.mxu0 0
    %1012 = vmatpush1.bf16.msra.mxu0 0
    %1013 = vmatprep.subr.bf16.mxu0 0
    %1014 = vmatpush1.bf16.msra.mxu0 0
    %1015 = vmatprep.subr.bf16.mxu0 0
    %1016 = vmatpush1.bf16.msra.mxu0 0
    %1017 = vmatprep.mubr.bf16.mxu0 0
    %1018 = vmatmul.mubr.bf16.gmra.mrb[0].mxu0 %v983
    %v1019 = vpop.f32.mrb[0].mxu0
    %v1020 = vadd.f32 0.0, %v1019
    %v1021 = vpop.f32.mrb[0].mxu0
    %v1022 = vadd.f32 0.0, %v1021
    %v1023 = vpop.f32.mrb[0].mxu0
    %v1024 = vpop.f32.mrb[0].mxu0
    %1025 = vdwg.mxu0
    %s1026 = scalar_lea.vmem [#allocation2], 12
    %v1027 = vld [vmem:[%s1026] sm:$0x3]
    %v1028 = vadd.f32 %v1027, %v1020
    %v1029 = vtanh.pop %v1028
    %v1030 = vmul.f32 %v1029, 0.5
    %v1031 = vadd.f32 %v1030, 0.5
    %v1032 = vmul.f32 %v1031, %v896
    %1034 = vrot.lane.b32.xlu0 %v1029, 64
    %v1035 = vpop.permute.xlu0 %1034
    %v1037 = vmul.f32 %v1031, %v1035
    %1039 = vrot.lane.b32.xlu0 %v1037, 32
    %v1040 = vpop.permute.xlu0 %1039
    %v1042 = vadd.f32 %v1032, %v1040
    %v1043 = vtanh.pop %v1042
    %1045 = vrot.lane.b32.xlu0 %v1043, 64
    %v1046 = vpop.permute.xlu0 %1045
    %v1048 = vmul.f32 %v1031, %v1046
    %v1050 = vrot.slane %v1022, 2
    %v1052 = vadd.f32 %v969, %v1050
    %v1053 = vtanh.pop %v1052
    %v1054 = vmul.f32 %v1053, 0.5
    %v1055 = vadd.f32 %v1054, 0.5
    %v1056 = vmul.f32 %v1055, %v920
    %1058 = vrot.lane.b32.xlu0 %v1053, 64
    %v1059 = vpop.permute.xlu0 %1058
    %v1061 = vmul.f32 %v1055, %v1059
    %1063 = vrot.lane.b32.xlu0 %v1061, 32
    %v1064 = vpop.permute.xlu0 %1063
    %v1066 = vadd.f32 %v1056, %v1064
    %v1067 = vtanh.pop %v1066
    %1069 = vrot.lane.b32.xlu0 %v1067, 64
    %v1070 = vpop.permute.xlu0 %1069
    %v1072 = vmul.f32 %v1055, %v1070
    %v1073 = vpack.c.bf16 %v1048, %v1048
    %1075 = vrot.lane.b32.xlu0 %v1073, 32
    %v1076 = vpop.permute.xlu0 %1075
    %v1078 = vsel %vm202, %v1076, 0
    %1080 = vmatprep.subr.bf16.mxu0 0
    %1081 = vmatpush1.bf16.msra.mxu0 %v198
    %1082 = vmatprep.subr.bf16.mxu0 0
    %1083 = vmatpush1.bf16.msra.mxu0 %v199
    %1084 = vmatprep.subr.bf16.mxu0 0
    %1085 = vmatpush1.bf16.msra.mxu0 0
    %1086 = vmatprep.subr.bf16.mxu0 0
    %1087 = vmatpush1.bf16.msra.mxu0 0
    %1088 = vmatprep.subr.bf16.mxu0 0
    %1089 = vmatpush1.bf16.msra.mxu0 0
    %1090 = vmatprep.subr.bf16.mxu0 0
    %1091 = vmatpush1.bf16.msra.mxu0 0
    %1092 = vmatprep.subr.bf16.mxu0 0
    %1093 = vmatpush1.bf16.msra.mxu0 0
    %1094 = vmatprep.subr.bf16.mxu0 0
    %1095 = vmatpush1.bf16.msra.mxu0 0
    %1096 = vmatprep.subr.bf16.mxu0 0
    %1097 = vmatpush1.bf16.msra.mxu0 0
    %1098 = vmatprep.subr.bf16.mxu0 0
    %1099 = vmatpush1.bf16.msra.mxu0 0
    %1100 = vmatprep.subr.bf16.mxu0 0
    %1101 = vmatpush1.bf16.msra.mxu0 0
    %1102 = vmatprep.subr.bf16.mxu0 0
    %1103 = vmatpush1.bf16.msra.mxu0 0
    %1104 = vmatprep.subr.bf16.mxu0 0
    %1105 = vmatpush1.bf16.msra.mxu0 0
    %1106 = vmatprep.subr.bf16.mxu0 0
    %1107 = vmatpush1.bf16.msra.mxu0 0
    %1108 = vmatprep.subr.bf16.mxu0 0
    %1109 = vmatpush1.bf16.msra.mxu0 0
    %1110 = vmatprep.subr.bf16.mxu0 0
    %1111 = vmatpush1.bf16.msra.mxu0 0
    %1112 = vmatprep.mubr.bf16.mxu0 0
    %1113 = vmatmul.mubr.bf16.gmra.mrb[0].mxu0 %v1078
    %v1114 = vpop.f32.mrb[0].mxu0
    %v1115 = vadd.f32 %v101, %v1114
    %v1116 = vpop.f32.mrb[0].mxu0
    %v1117 = vpop.f32.mrb[0].mxu0
    %v1118 = vpop.f32.mrb[0].mxu0
    %1119 = vdwg.mxu0
    %v1121 = vrot.slane %v1072, 6
    %v1123 = vsel %vm246, %v1048, %v1121
    %v1124 = vpack.c.bf16 %v1123, %v1123
    %1126 = vrot.lane.b32.xlu0 %v1124, 32
    %v1127 = vpop.permute.xlu0 %1126
    %v1129 = vsel %vm202, %v1127, 0
    %1131 = vmatprep.subr.bf16.mxu0 %v92
    %1132 = vmatpush1.bf16.msra.mxu0 %v80
    %1133 = vmatprep.subr.bf16.mxu0 %v93
    %1134 = vmatpush1.bf16.msra.mxu0 %v81
    %1135 = vmatprep.subr.bf16.mxu0 0
    %1136 = vmatpush1.bf16.msra.mxu0 0
    %1137 = vmatprep.subr.bf16.mxu0 0
    %1138 = vmatpush1.bf16.msra.mxu0 0
    %1139 = vmatprep.subr.bf16.mxu0 0
    %1140 = vmatpush1.bf16.msra.mxu0 0
    %1141 = vmatprep.subr.bf16.mxu0 0
    %1142 = vmatpush1.bf16.msra.mxu0 0
    %1143 = vmatprep.subr.bf16.mxu0 0
    %1144 = vmatpush1.bf16.msra.mxu0 0
    %1145 = vmatprep.subr.bf16.mxu0 0
    %1146 = vmatpush1.bf16.msra.mxu0 0
    %1147 = vmatprep.subr.bf16.mxu0 0
    %1148 = vmatpush1.bf16.msra.mxu0 0
    %1149 = vmatprep.subr.bf16.mxu0 0
    %1150 = vmatpush1.bf16.msra.mxu0 0
    %1151 = vmatprep.subr.bf16.mxu0 0
    %1152 = vmatpush1.bf16.msra.mxu0 0
    %1153 = vmatprep.subr.bf16.mxu0 0
    %1154 = vmatpush1.bf16.msra.mxu0 0
    %1155 = vmatprep.subr.bf16.mxu0 0
    %1156 = vmatpush1.bf16.msra.mxu0 0
    %1157 = vmatprep.subr.bf16.mxu0 0
    %1158 = vmatpush1.bf16.msra.mxu0 0
    %1159 = vmatprep.subr.bf16.mxu0 0
    %1160 = vmatpush1.bf16.msra.mxu0 0
    %1161 = vmatprep.subr.bf16.mxu0 0
    %1162 = vmatpush1.bf16.msra.mxu0 0
    %1163 = vmatprep.mubr.bf16.mxu0 0
    %1164 = vmatmul.mubr.bf16.gmra.mrb[0].mxu0 %v1129
    %v1165 = vpop.f32.mrb[0].mxu0
    %v1166 = vadd.f32 0.0, %v1165
    %v1167 = vpop.f32.mrb[0].mxu0
    %v1168 = vadd.f32 0.0, %v1167
    %v1169 = vpop.f32.mrb[0].mxu0
    %v1170 = vpop.f32.mrb[0].mxu0
    %1171 = vdwg.mxu0
    %s1172 = scalar_lea.vmem [#allocation2], 14
    %v1173 = vld [vmem:[%s1172] sm:$0x3]
    %v1174 = vadd.f32 %v1173, %v1166
    %v1175 = vtanh.pop %v1174
    %v1176 = vmul.f32 %v1175, 0.5
    %v1177 = vadd.f32 %v1176, 0.5
    %v1178 = vmul.f32 %v1177, %v1042
    %1180 = vrot.lane.b32.xlu0 %v1175, 64
    %v1181 = vpop.permute.xlu0 %1180
    %v1183 = vmul.f32 %v1177, %v1181
    %1185 = vrot.lane.b32.xlu0 %v1183, 32
    %v1186 = vpop.permute.xlu0 %1185
    %v1188 = vadd.f32 %v1178, %v1186
    %v1189 = vtanh.pop %v1188
    %1191 = vrot.lane.b32.xlu0 %v1189, 64
    %v1192 = vpop.permute.xlu0 %1191
    %v1194 = vmul.f32 %v1177, %v1192
    %v1196 = vrot.slane %v1168, 2
    %v1198 = vadd.f32 %v1115, %v1196
    %v1199 = vtanh.pop %v1198
    %v1200 = vmul.f32 %v1199, 0.5
    %v1201 = vadd.f32 %v1200, 0.5
    %v1202 = vmul.f32 %v1201, %v1066
    %1204 = vrot.lane.b32.xlu0 %v1199, 64
    %v1205 = vpop.permute.xlu0 %1204
    %v1207 = vmul.f32 %v1201, %v1205
    %1209 = vrot.lane.b32.xlu0 %v1207, 32
    %v1210 = vpop.permute.xlu0 %1209
    %v1212 = vadd.f32 %v1202, %v1210
    %v1213 = vtanh.pop %v1212
    %1215 = vrot.lane.b32.xlu0 %v1213, 64
    %v1216 = vpop.permute.xlu0 %1215
    %v1218 = vmul.f32 %v1201, %v1216
    %v1219 = vpack.c.bf16 %v1194, %v1194
    %1221 = vrot.lane.b32.xlu0 %v1219, 32
    %v1222 = vpop.permute.xlu0 %1221
    %v1224 = vsel %vm202, %v1222, 0
    %1226 = vmatprep.subr.bf16.mxu0 0
    %1227 = vmatpush1.bf16.msra.mxu0 %v198
    %1228 = vmatprep.subr.bf16.mxu0 0
    %1229 = vmatpush1.bf16.msra.mxu0 %v199
    %1230 = vmatprep.subr.bf16.mxu0 0
    %1231 = vmatpush1.bf16.msra.mxu0 0
    %1232 = vmatprep.subr.bf16.mxu0 0
    %1233 = vmatpush1.bf16.msra.mxu0 0
    %1234 = vmatprep.subr.bf16.mxu0 0
    %1235 = vmatpush1.bf16.msra.mxu0 0
    %1236 = vmatprep.subr.bf16.mxu0 0
    %1237 = vmatpush1.bf16.msra.mxu0 0
    %1238 = vmatprep.subr.bf16.mxu0 0
    %1239 = vmatpush1.bf16.msra.mxu0 0
    %1240 = vmatprep.subr.bf16.mxu0 0
    %1241 = vmatpush1.bf16.msra.mxu0 0
    %1242 = vmatprep.subr.bf16.mxu0 0
    %1243 = vmatpush1.bf16.msra.mxu0 0
    %1244 = vmatprep.subr.bf16.mxu0 0
    %1245 = vmatpush1.bf16.msra.mxu0 0
    %1246 = vmatprep.subr.bf16.mxu0 0
    %1247 = vmatpush1.bf16.msra.mxu0 0
    %1248 = vmatprep.subr.bf16.mxu0 0
    %1249 = vmatpush1.bf16.msra.mxu0 0
    %1250 = vmatprep.subr.bf16.mxu0 0
    %1251 = vmatpush1.bf16.msra.mxu0 0
    %1252 = vmatprep.subr.bf16.mxu0 0
    %1253 = vmatpush1.bf16.msra.mxu0 0
    %1254 = vmatprep.subr.bf16.mxu0 0
    %1255 = vmatpush1.bf16.msra.mxu0 0
    %1256 = vmatprep.subr.bf16.mxu0 0
    %1257 = vmatpush1.bf16.msra.mxu0 0
    %1258 = vmatprep.mubr.bf16.mxu0 0
    %1259 = vmatmul.mubr.bf16.gmra.mrb[0].mxu0 %v1224
    %v1260 = vpop.f32.mrb[0].mxu0
    %v1261 = vadd.f32 %v101, %v1260
    %v1262 = vpop.f32.mrb[0].mxu0
    %v1263 = vpop.f32.mrb[0].mxu0
    %v1264 = vpop.f32.mrb[0].mxu0
    %1265 = vdwg.mxu0
    %v1266 = vpack.c.bf16 %v1218, %v1218
    %v1267 = vld [vmem:[#allocation6] sm:$0xf]
    %v1268 = vld [vmem:[#allocation6 + $0x4] sm:$0xf]
    %v1269 = vld [vmem:[#allocation6 + $0x8] sm:$0xf]
    %v1270 = vld [vmem:[#allocation6 + $0xc] sm:$0xf]
    %1272 = vrot.lane.b32.xlu0 %v1266, 32
    %v1273 = vpop.permute.xlu0 %1272
    %v1278 = vunpack.c.l.b16 %v1267
    %v1279 = vunpack.c.l.b16 %v1268
    %v1280 = vunpack.c.l.b16 %v1269
    %v1281 = vunpack.c.l.b16 %v1270
    %v1282 = vpack.c.b16 %v1279, %v1278
    %v1283 = vpack.c.b16 %v1281, %v1280
    %v1287 = vsel %vm202, %v1273, 0
    %1289 = vmatprep.subr.bf16.mxu0 0
    %1290 = vmatpush1.bf16.msra.mxu0 %v1282
    %1291 = vmatprep.subr.bf16.mxu0 0
    %1292 = vmatpush1.bf16.msra.mxu0 %v1283
    %1293 = vmatprep.subr.bf16.mxu0 0
    %1294 = vmatpush1.bf16.msra.mxu0 0
    %1295 = vmatprep.subr.bf16.mxu0 0
    %1296 = vmatpush1.bf16.msra.mxu0 0
    %1297 = vmatprep.subr.bf16.mxu0 0
    %1298 = vmatpush1.bf16.msra.mxu0 0
    %1299 = vmatprep.subr.bf16.mxu0 0
    %1300 = vmatpush1.bf16.msra.mxu0 0
    %1301 = vmatprep.subr.bf16.mxu0 0
    %1302 = vmatpush1.bf16.msra.mxu0 0
    %1303 = vmatprep.subr.bf16.mxu0 0
    %1304 = vmatpush1.bf16.msra.mxu0 0
    %1305 = vmatprep.subr.bf16.mxu0 0
    %1306 = vmatpush1.bf16.msra.mxu0 0
    %1307 = vmatprep.subr.bf16.mxu0 0
    %1308 = vmatpush1.bf16.msra.mxu0 0
    %1309 = vmatprep.subr.bf16.mxu0 0
    %1310 = vmatpush1.bf16.msra.mxu0 0
    %1311 = vmatprep.subr.bf16.mxu0 0
    %1312 = vmatpush1.bf16.msra.mxu0 0
    %1313 = vmatprep.subr.bf16.mxu0 0
    %1314 = vmatpush1.bf16.msra.mxu0 0
    %1315 = vmatprep.subr.bf16.mxu0 0
    %1316 = vmatpush1.bf16.msra.mxu0 0
    %1317 = vmatprep.subr.bf16.mxu0 0
    %1318 = vmatpush1.bf16.msra.mxu0 0
    %1319 = vmatprep.subr.bf16.mxu0 0
    %1320 = vmatpush1.bf16.msra.mxu0 0
    %1321 = vmatprep.mubr.bf16.mxu0 0
    %1322 = vmatmul.mubr.bf16.gmra.mrb[0].mxu0 %v1287
    %v1323 = vpop.f32.mrb[0].mxu0
    %v1324 = vadd.f32 0.0, %v1323
    %v1325 = vpop.f32.mrb[0].mxu0
    %v1326 = vpop.f32.mrb[0].mxu0
    %v1327 = vpop.f32.mrb[0].mxu0
    %1328 = vdwg.mxu0
    %v1329 = vadd.f32 %v1261, %v1324
    %v1330 = vtanh.pop %v1329
    %v1331 = vmul.f32 %v1330, 0.5
    %v1332 = vadd.f32 %v1331, 0.5
    %v1333 = vmul.f32 %v1332, %v1212
    %1335 = vrot.lane.b32.xlu0 %v1330, 64
    %v1336 = vpop.permute.xlu0 %1335
    %v1338 = vmul.f32 %v1332, %v1336
    %1340 = vrot.lane.b32.xlu0 %v1338, 32
    %v1341 = vpop.permute.xlu0 %1340
    %v1343 = vadd.f32 %v1333, %v1341
    %v1344 = vtanh.pop %v1343
    %1346 = vrot.lane.b32.xlu0 %v1344, 64
    %v1347 = vpop.permute.xlu0 %1346
    %v1349 = vmul.f32 %v1332, %v1347
    %v1350 = vpack.c.bf16 %v1349, %v1349
    %v1351 = vld [vmem:[%s7] sm:$0xf]
    %v1352 = vld [vmem:[%s7 + $0x4] sm:$0xf]
    %v1353 = vld [vmem:[%s7 + $0x8] sm:$0xf]
    %v1354 = vld [vmem:[%s7 + $0xc] sm:$0xf]
    %v1355 = vld [vmem:[%s8] sm:$0x1]
    %v1357 = vlaneseq
    %v1358 = vshrl.u32 %v1357, 7
    %v1359 = vsub.s32 0, %v1358
    %v1360 = vrot.slane %v1355, %v1359
    %1363 = vrot.lane.b32.xlu0 %v1350, 32
    %v1364 = vpop.permute.xlu0 %1363
    %v1369 = vunpack.c.l.b16 %v1351
    %v1370 = vunpack.c.l.b16 %v1352
    %v1371 = vunpack.c.l.b16 %v1353
    %v1372 = vunpack.c.l.b16 %v1354
    %v1373 = vpack.c.b16 %v1370, %v1369
    %v1374 = vpack.c.b16 %v1372, %v1371
    %v1378 = vsel %vm202, %v1364, 0
    %1380 = vmatprep.subr.bf16.mxu0 0
    %1381 = vmatpush1.bf16.msra.mxu0 %v1373
    %1382 = vmatprep.subr.bf16.mxu0 0
    %1383 = vmatpush1.bf16.msra.mxu0 %v1374
    %1384 = vmatprep.subr.bf16.mxu0 0
    %1385 = vmatpush1.bf16.msra.mxu0 0
    %1386 = vmatprep.subr.bf16.mxu0 0
    %1387 = vmatpush1.bf16.msra.mxu0 0
    %1388 = vmatprep.subr.bf16.mxu0 0
    %1389 = vmatpush1.bf16.msra.mxu0 0
    %1390 = vmatprep.subr.bf16.mxu0 0
    %1391 = vmatpush1.bf16.msra.mxu0 0
    %1392 = vmatprep.subr.bf16.mxu0 0
    %1393 = vmatpush1.bf16.msra.mxu0 0
    %1394 = vmatprep.subr.bf16.mxu0 0
    %1395 = vmatpush1.bf16.msra.mxu0 0
    %1396 = vmatprep.subr.bf16.mxu0 0
    %1397 = vmatpush1.bf16.msra.mxu0 0
    %1398 = vmatprep.subr.bf16.mxu0 0
    %1399 = vmatpush1.bf16.msra.mxu0 0
    %1400 = vmatprep.subr.bf16.mxu0 0
    %1401 = vmatpush1.bf16.msra.mxu0 0
    %1402 = vmatprep.subr.bf16.mxu0 0
    %1403 = vmatpush1.bf16.msra.mxu0 0
    %1404 = vmatprep.subr.bf16.mxu0 0
    %1405 = vmatpush1.bf16.msra.mxu0 0
    %1406 = vmatprep.subr.bf16.mxu0 0
    %1407 = vmatpush1.bf16.msra.mxu0 0
    %1408 = vmatprep.subr.bf16.mxu0 0
    %1409 = vmatpush1.bf16.msra.mxu0 0
    %1410 = vmatprep.subr.bf16.mxu0 0
    %1411 = vmatpush1.bf16.msra.mxu0 0
    %1412 = vmatprep.mubr.bf16.mxu0 0
    %1413 = vmatmul.mubr.bf16.gmra.mrb[0].mxu0 %v1378
    %v1414 = vpop.f32.mrb[0].mxu0
    %v1415 = vadd.f32 %v1360, %v1414
    %v1416 = vpop.f32.mrb[0].mxu0
    %v1417 = vpop.f32.mrb[0].mxu0
    %v1418 = vpop.f32.mrb[0].mxu0
    %1419 = vdwg.mxu0
    %vm1420 = vcmask 287744
    %1421 = vst.msk [vmem:[#allocation8] sm:$0x3] %vm1420, %v1415
    // Predicated region
    $region46: #{tpu_custom_call.1} parent=1 // pred_check
      _
    $region47: #{tpu_custom_call.1} parent=1 // pred_check_branch
      %1423 = sbr.rel (0) target = $region49
    $region48: #{tpu_custom_call.1} parent=1 // pred_region
      %s1425 = ssub.s32 32, 32
      %1426 = vsyncadd [#allocation5], %s1425
      %s1428 = sshll.u32 [#allocation8], 4
      %s1429 = int_to_ptr.vmem [resolvable:$true] %s1428
      %1431 = dma.vmem_to_hbm [thread:$0]  %s1429, 32, %s9, [#allocation5]
    $region49: #{tpu_custom_call.1} parent=1 // pred_fallthru
      _
    // Predicated region
    $region50: #{tpu_custom_call.1} parent=1 // pred_check
      _
    $region51: #{tpu_custom_call.1} parent=1 // pred_check_branch
      %1433 = sbr.rel (0) target = $region53
    $region52: #{tpu_custom_call.1} parent=1 // pred_region
      %1434 = dma.done [#allocation5], 32
    $region53: #{tpu_custom_call.1} parent=1 // pred_fallthru
      _
    %1435 = vsyncpa [#allocation4], 1
    %1436 = vsyncpa [#allocation7], 1
    %1437 = vsyncpa [#allocation5], 1

</llo_original>
